<compile_context>
chip_gen: v7x
topology: tpu7x:2x2x1
jax: 0.10.0
libtpu: 0.0.40
codegen_flags: <defaults>
</compile_context>

<pallas_src>
import jax
import jax.numpy as jnp
from jax.experimental import pallas as pl
from jax.experimental.pallas import tpu as pltpu  # noqa: F401  (TPU backend)

SEQ = 384
HID = 256
EPS = 1e-12


def _fused_kernel(x_ref, w_ref, params_ref, res_ref, o_ref):
    # x_ref:      (SEQ, HID) bf16  input rows (already viewed to [*, 256])
    # w_ref:      (HID, HID) bf16  linear weight, laid out as (in, out)
    # params_ref: (8, HID)   f32   row0 = bias, row1 = gamma, row2 = beta
    # res_ref:    (SEQ, HID) f32   residual (x197 rows)
    # o_ref:      (SEQ, HID) f32   output rows

    # Linear: native bf16 MXU pass, f32 accumulation.
    y = jnp.dot(x_ref[...], w_ref[...], preferred_element_type=jnp.float32)

    p = params_ref[...]
    bias = p[0:1, :]
    gamma = p[1:2, :]
    beta = p[2:3, :]

    # Dropout(p=0.1) in inference mode is the identity.
    # TODO(synk): training-mode dropout (RNG mask + 1/(1-p) scale) not emitted.

    # Bias + residual add (all f32 from here on).
    y = y + bias + res_ref[...]

    # LayerNorm over last dim, eps=1e-12, elementwise affine.
    # Single fused reduction pass: var = E[y^2] - mean^2 (clamped >= 0).
    mean = jnp.mean(y, axis=-1, keepdims=True)
    ey2 = jnp.mean(y * y, axis=-1, keepdims=True)
    var = jnp.maximum(ey2 - mean * mean, 0.0)
    inv = jax.lax.rsqrt(var + EPS)

    o_ref[...] = ((y - mean) * inv * gamma + beta).astype(o_ref.dtype)


def fused_linear_add_layernorm(x, w_t, b, res, gamma, beta):
    """x: [SEQ, HID] f32, w_t: [HID, HID] (in,out), b/gamma/beta: [HID], res: [SEQ, HID]."""
    seq, hid = x.shape

    # bf16 matmul operands (MXU-native on v5e/v6e/v7x); residual & params stay f32.
    x_bf = x.astype(jnp.bfloat16)
    w_bf = w_t.astype(jnp.bfloat16)

    # Pack bias / gamma / beta into one (8, hid) f32 slab -> one DMA instead of 3.
    params = (
        jnp.zeros((8, hid), jnp.float32)
        .at[0].set(b.astype(jnp.float32))
        .at[1].set(gamma.astype(jnp.float32))
        .at[2].set(beta.astype(jnp.float32))
    )

    bytes_accessed = (
        x_bf.size * 2 + w_bf.size * 2 + params.size * 4
        + res.size * 4 + seq * hid * 4  # output writeback (f32)
    )

    out = pl.pallas_call(
        _fused_kernel,
        out_shape=jax.ShapeDtypeStruct((seq, hid), jnp.float32),
        in_specs=[
            pl.BlockSpec((seq, hid), lambda: (0, 0)),   # x rows   (bf16)
            pl.BlockSpec((hid, hid), lambda: (0, 0)),   # weight   (bf16, loaded once)
            pl.BlockSpec((8, hid), lambda: (0, 0)),     # packed bias/gamma/beta
            pl.BlockSpec((seq, hid), lambda: (0, 0)),   # residual (f32)
        ],
        out_specs=pl.BlockSpec((seq, hid), lambda: (0, 0)),
        cost_estimate=pl.CostEstimate(
            flops=2 * seq * hid * hid,
            bytes_accessed=bytes_accessed,
            transcendentals=0,
        ),
    )(x_bf, w_bf, params, res)
    return out


def module_forward(x225, x228, x197, params):
    # x225: [1, 384, 4, 64], x228: target shape tuple, x197: [1, 384, 256]
    x229 = x225.reshape(x228)            # view -> [1, 384, 256]
    x2d = x229.reshape(-1, HID)          # [384, 256]
    res2d = x197.reshape(-1, HID)        # [384, 256]
    out2d = fused_linear_add_layernorm(
        x2d, params["w_t"], params["b"], res2d, params["gamma"], params["beta"]
    )
    return out2d.reshape(x228)


if __name__ == "__main__":
    key = jax.random.PRNGKey(0)
    k1, k2, k3, k4 = jax.random.split(key, 4)

    # Inputs (same shapes the PyTorch module uses)
    x225 = jax.random.normal(k1, (1, SEQ, 4, 64), dtype=jnp.float32)
    x197 = jax.random.normal(k2, (1, SEQ, HID), dtype=jnp.float32)
    x228 = (1, SEQ, HID)

    # Deterministic parameter init (nn.Linear(256,256) / LayerNorm(256)).
    # PyTorch Linear stores weight as (out, in); we pass its transpose (in, out).
    w = jax.random.normal(k3, (HID, HID), dtype=jnp.float32) * 0.02   # (out, in)
    b = jax.random.normal(k4, (HID,), dtype=jnp.float32) * 0.02
    gamma = jnp.ones((HID,), dtype=jnp.float32)
    beta = jnp.zeros((HID,), dtype=jnp.float32)
    params = {"w_t": w.T, "b": b, "gamma": gamma, "beta": beta}

    out = module_forward(x225, x228, x197, params)
    jax.block_until_ready(out)

    # Reference in plain JAX, with the same bf16 operand rounding for the matmul.
    x2d = x225.reshape(x228).reshape(-1, HID)
    xb = x2d.astype(jnp.bfloat16).astype(jnp.float32)
    wb = w.T.astype(jnp.bfloat16).astype(jnp.float32)
    y_ref = xb @ wb + b + x197.reshape(-1, HID)
    mu = y_ref.mean(axis=-1, keepdims=True)
    var = ((y_ref - mu) ** 2).mean(axis=-1, keepdims=True)
    ref = ((y_ref - mu) / jnp.sqrt(var + EPS)) * gamma + beta
    ref = ref.reshape(x228)
    assert jnp.allclose(out, ref, atol=5e-3, rtol=1e-3), "mismatch vs reference"

    # Sanity check against the exact-f32 reference (bf16 operand rounding only).
    y_f32 = x2d @ w.T + b + x197.reshape(-1, HID)
    mu2 = y_f32.mean(axis=-1, keepdims=True)
    var2 = ((y_f32 - mu2) ** 2).mean(axis=-1, keepdims=True)
    ref_f32 = (((y_f32 - mu2) / jnp.sqrt(var2 + EPS)) * gamma + beta).reshape(x228)
    assert jnp.allclose(out, ref_f32, atol=3e-2, rtol=0), "drift vs f32 reference"

    assert out.shape == (1, SEQ, HID)
    print("KERNEL_OK")
</pallas_src>

<mosaic_0001>
module attributes {stable_mosaic.version = 11 : i64} {
  func.func @_fused_kernel(%arg0: memref<384x256xbf16, #tpu.memory_space<vmem>>, %arg1: memref<256x256xbf16, #tpu.memory_space<vmem>>, %arg2: memref<8x256xf32, #tpu.memory_space<vmem>>, %arg3: memref<384x256xf32, #tpu.memory_space<vmem>>, %arg4: memref<384x256xf32, #tpu.memory_space<vmem>>) attributes {dimension_semantics = [], scalar_prefetch = 0 : i64, scratch_operands = 0 : i64, tpu.core_type = #tpu.core_type<tc>} {
    %c0 = arith.constant 0 : index
    %c0_0 = arith.constant 0 : index
    %0 = vector.load %arg0[%c0, %c0_0] : memref<384x256xbf16, #tpu.memory_space<vmem>>, vector<384x256xbf16>
    %c0_1 = arith.constant 0 : index
    %c0_2 = arith.constant 0 : index
    %1 = vector.load %arg1[%c0_1, %c0_2] : memref<256x256xbf16, #tpu.memory_space<vmem>>, vector<256x256xbf16>
    %cst = arith.constant dense<0.000000e+00> : vector<384x256xf32>
    %2 = tpu.matmul %0, %1, %cst {dimension_numbers = #tpu.dot_dimension_numbers<[1], [0], [0], [1], [0, 0, 1, 1], [], []>} : vector<384x256xbf16>, vector<256x256xbf16>, vector<384x256xf32> -> vector<384x256xf32>
    %c0_3 = arith.constant 0 : index
    %c0_4 = arith.constant 0 : index
    %3 = vector.load %arg2[%c0_3, %c0_4] : memref<8x256xf32, #tpu.memory_space<vmem>>, vector<8x256xf32>
    %4 = vector.extract_strided_slice %3 {offsets = [0, 0], sizes = [1, 256], strides = [1, 1]} : vector<8x256xf32> to vector<1x256xf32>
    %5 = vector.extract_strided_slice %3 {offsets = [1, 0], sizes = [1, 256], strides = [1, 1]} : vector<8x256xf32> to vector<1x256xf32>
    %6 = vector.extract_strided_slice %3 {offsets = [2, 0], sizes = [1, 256], strides = [1, 1]} : vector<8x256xf32> to vector<1x256xf32>
    %7 = vector.broadcast %4 : vector<1x256xf32> to vector<384x256xf32>
    %8 = arith.addf %2, %7 : vector<384x256xf32>
    %c0_5 = arith.constant 0 : index
    %c0_6 = arith.constant 0 : index
    %9 = vector.load %arg3[%c0_5, %c0_6] : memref<384x256xf32, #tpu.memory_space<vmem>>, vector<384x256xf32>
    %10 = arith.addf %8, %9 : vector<384x256xf32>
    %cst_7 = arith.constant dense<0.000000e+00> : vector<384xf32>
    %11 = vector.multi_reduction <add>, %10, %cst_7 [1] : vector<384x256xf32> to vector<384xf32>
    %12 = vector.shape_cast %11 : vector<384xf32> to vector<384x1xf32>
    %cst_8 = arith.constant 2.560000e+02 : f32
    %13 = vector.broadcast %cst_8 : f32 to vector<384x1xf32>
    %14 = arith.divf %12, %13 : vector<384x1xf32>
    %15 = arith.mulf %10, %10 : vector<384x256xf32>
    %cst_9 = arith.constant dense<0.000000e+00> : vector<384xf32>
    %16 = vector.multi_reduction <add>, %15, %cst_9 [1] : vector<384x256xf32> to vector<384xf32>
    %17 = vector.shape_cast %16 : vector<384xf32> to vector<384x1xf32>
    %cst_10 = arith.constant 2.560000e+02 : f32
    %18 = vector.broadcast %cst_10 : f32 to vector<384x1xf32>
    %19 = arith.divf %17, %18 : vector<384x1xf32>
    %20 = arith.mulf %14, %14 : vector<384x1xf32>
    %21 = arith.subf %19, %20 : vector<384x1xf32>
    %cst_11 = arith.constant 0.000000e+00 : f32
    %22 = vector.broadcast %cst_11 : f32 to vector<384x1xf32>
    %23 = arith.maximumf %21, %22 : vector<384x1xf32>
    %cst_12 = arith.constant 9.99999996E-13 : f32
    %24 = vector.broadcast %cst_12 : f32 to vector<384x1xf32>
    %25 = arith.addf %23, %24 : vector<384x1xf32>
    %26 = math.rsqrt %25 : vector<384x1xf32>
    %27 = vector.broadcast %14 : vector<384x1xf32> to vector<384x256xf32>
    %28 = arith.subf %10, %27 : vector<384x256xf32>
    %29 = vector.broadcast %26 : vector<384x1xf32> to vector<384x256xf32>
    %30 = arith.mulf %28, %29 : vector<384x256xf32>
    %31 = vector.broadcast %5 : vector<1x256xf32> to vector<384x256xf32>
    %32 = arith.mulf %30, %31 : vector<384x256xf32>
    %33 = vector.broadcast %6 : vector<1x256xf32> to vector<384x256xf32>
    %34 = arith.addf %32, %33 : vector<384x256xf32>
    %c0_13 = arith.constant 0 : index
    %c0_14 = arith.constant 0 : index
    %35 = vector.load %arg4[%c0_13, %c0_14] : memref<384x256xf32, #tpu.memory_space<vmem>>, vector<384x256xf32>
    tpu.vector_store %arg4[%c0_13, %c0_14], %34 {strides = array<i32>} : memref<384x256xf32, #tpu.memory_space<vmem>>, vector<384x256xf32>,
    return
  }
}

</mosaic_0001>

<llo_original>
// kernel: tpu_custom_call.1
$region0: #{tpu_custom_call.1}
  #allocation0 [shape = 'u32[]', space=smem, size = 0x4, offset = 0x4, fixed_abs, tag = 'smem constant byte address 0x4 - core index']
  #allocation1 [shape = 'u32[144,128]{1,0:T(1,128)}', space=vmem, size = 0x12000, scoped, tag = 'internal scratch']
  %s0 = inlined_call_operand.hbm [shape: bf16[384,256], index: 0, kind: input, shape index: {}]
  %s1 = inlined_call_operand.hbm [shape: bf16[256,256], index: 1, kind: input, shape index: {}]
  %s2 = inlined_call_operand.hbm [shape: f32[8,256], index: 2, kind: input, shape index: {}]
  %s3 = inlined_call_operand.hbm [shape: f32[384,256], index: 3, kind: input, shape index: {}]
  %s4 = inlined_call_operand.hbm [shape: f32[384,256], index: 4, kind: output, shape index: {}]
  %s5 = sld [smem:[#allocation0]]
  $region42: #{tpu_custom_call.1} parent=0
    _
  %s7 = ssub.s32 1, %s5
  %s8 = scalar_select 0, %s7, %s5
  $region1: #{tpu_custom_call.1} parent=0
    #allocation2 [shape = 'u8[196608]{0}', space=vmem, size = 0x30000, scoped, tag = 'input window, operand 0, single buffered']
    #allocation3 [shape = 's32[1]{0}', space=sflag, size = 0x4, scoped, tag = 'scoped memory for tpu_custom_call.1']
    #allocation4 [shape = 's32[1]{0}', space=sflag, size = 0x4, scoped, tag = 'scoped memory for tpu_custom_call.1']
    #allocation5 [shape = 'u8[131072]{0}', space=vmem, size = 0x20000, scoped, tag = 'input window, operand 1, single buffered']
    #allocation6 [shape = 's32[1]{0}', space=sflag, size = 0x4, scoped, tag = 'scoped memory for tpu_custom_call.1']
    #allocation7 [shape = 'u8[8192]{0}', space=vmem, size = 0x2000, scoped, tag = 'input window, operand 2, single buffered']
    #allocation8 [shape = 'u8[393216]{0}', space=vmem, size = 0x60000, scoped, tag = 'input window, operand 3, single buffered']
    #allocation9 [shape = 's32[1]{0}', space=sflag, size = 0x4, scoped, tag = 'scoped memory for tpu_custom_call.1']
    #allocation10 [shape = 'u8[393216]{0}', space=vmem, size = 0x60000, scoped, tag = 'output window, operand 0, single buffered']
    %9 = vsyncpa [#allocation3], 0
    %10 = vsyncpa [#allocation6], 0
    %11 = vsyncpa [#allocation9], 0
    %12 = vsyncpa [#allocation4], 0
    // Predicated region
    $region2: #{tpu_custom_call.1} parent=1 // pred_check
      _
    $region3: #{tpu_custom_call.1} parent=1 // pred_check_branch
      %14 = sbr.rel (0) target = $region5
    $region4: #{tpu_custom_call.1} parent=1 // pred_region
      %s16 = ssub.s32 6144, 6144
      %17 = vsyncadd [#allocation3], %s16
      %s18 = sshll.u32 [#allocation2], 4
      %s19 = int_to_ptr.vmem [resolvable:$true] %s18
      %24 = dma.hbm_to_vmem [thread:$0]  %s0, 6144, %s19, [#allocation3], 128, 128, 8
    $region5: #{tpu_custom_call.1} parent=1 // pred_fallthru
      _
    // Predicated region
    $region6: #{tpu_custom_call.1} parent=1 // pred_check
      _
    $region7: #{tpu_custom_call.1} parent=1 // pred_check_branch
      %26 = sbr.rel (0) target = $region9
    $region8: #{tpu_custom_call.1} parent=1 // pred_region
      %s28 = ssub.s32 4096, 4096
      %29 = vsyncadd [#allocation6], %s28
      %s30 = sshll.u32 [#allocation5], 4
      %s31 = int_to_ptr.vmem [resolvable:$true] %s30
      %36 = dma.hbm_to_vmem [thread:$0]  %s1, 4096, %s31, [#allocation6], 128, 128, 8
    $region9: #{tpu_custom_call.1} parent=1 // pred_fallthru
      _
    // Predicated region
    $region10: #{tpu_custom_call.1} parent=1 // pred_check
      _
    $region11: #{tpu_custom_call.1} parent=1 // pred_check_branch
      %38 = sbr.rel (0) target = $region13
    $region12: #{tpu_custom_call.1} parent=1 // pred_region
      %s40 = ssub.s32 256, 256
      %41 = vsyncadd [#allocation6], %s40
      %s43 = sshll.u32 [#allocation7], 4
      %s44 = int_to_ptr.vmem [resolvable:$true] %s43
      %46 = dma.hbm_to_vmem [thread:$0]  %s2, 256, %s44, [#allocation6]
    $region13: #{tpu_custom_call.1} parent=1 // pred_fallthru
      _
    // Predicated region
    $region14: #{tpu_custom_call.1} parent=1 // pred_check
      _
    $region15: #{tpu_custom_call.1} parent=1 // pred_check_branch
      %48 = sbr.rel (0) target = $region17
    $region16: #{tpu_custom_call.1} parent=1 // pred_region
      %s50 = ssub.s32 12288, 12288
      %51 = vsyncadd [#allocation9], %s50
      %s52 = sshll.u32 [#allocation8], 4
      %s53 = int_to_ptr.vmem [resolvable:$true] %s52
      %58 = dma.hbm_to_vmem [thread:$0]  %s3, 12288, %s53, [#allocation9], 256, 256, 16
    $region17: #{tpu_custom_call.1} parent=1 // pred_fallthru
      _
    // Predicated region
    $region18: #{tpu_custom_call.1} parent=1 // pred_check
      _
    $region19: #{tpu_custom_call.1} parent=1 // pred_check_branch
      %60 = sbr.rel (0) target = $region21
    $region20: #{tpu_custom_call.1} parent=1 // pred_region
      %61 = dma.done [#allocation3], 6144
    $region21: #{tpu_custom_call.1} parent=1 // pred_fallthru
      _
    // Predicated region
    $region22: #{tpu_custom_call.1} parent=1 // pred_check
      _
    $region23: #{tpu_custom_call.1} parent=1 // pred_check_branch
      %63 = sbr.rel (0) target = $region25
    $region24: #{tpu_custom_call.1} parent=1 // pred_region
      %64 = dma.done [#allocation6], 4096
    $region25: #{tpu_custom_call.1} parent=1 // pred_fallthru
      _
    // Predicated region
    $region26: #{tpu_custom_call.1} parent=1 // pred_check
      _
    $region27: #{tpu_custom_call.1} parent=1 // pred_check_branch
      %66 = sbr.rel (0) target = $region29
    $region28: #{tpu_custom_call.1} parent=1 // pred_region
      %67 = dma.done [#allocation6], 256
    $region29: #{tpu_custom_call.1} parent=1 // pred_fallthru
      _
    // Predicated region
    $region30: #{tpu_custom_call.1} parent=1 // pred_check
      _
    $region31: #{tpu_custom_call.1} parent=1 // pred_check_branch
      %69 = sbr.rel (0) target = $region33
    $region32: #{tpu_custom_call.1} parent=1 // pred_region
      %70 = dma.done [#allocation9], 12288
    $region33: #{tpu_custom_call.1} parent=1 // pred_fallthru
      _
    %v71 = vld [vmem:[#allocation2] sm:$0xff]
    %v72 = vld [vmem:[#allocation2 + $0x8] sm:$0xff]
    %v73 = vld [vmem:[#allocation2 + $0x10] sm:$0xff]
    %v74 = vld [vmem:[#allocation2 + $0x18] sm:$0xff]
    %v75 = vld [vmem:[#allocation2 + $0x20] sm:$0xff]
    %v76 = vld [vmem:[#allocation2 + $0x28] sm:$0xff]
    %v77 = vld [vmem:[#allocation2 + $0x30] sm:$0xff]
    %v78 = vld [vmem:[#allocation2 + $0x38] sm:$0xff]
    %v79 = vld [vmem:[#allocation2 + $0x40] sm:$0xff]
    %v80 = vld [vmem:[#allocation2 + $0x48] sm:$0xff]
    %v81 = vld [vmem:[#allocation2 + $0x50] sm:$0xff]
    %v82 = vld [vmem:[#allocation2 + $0x58] sm:$0xff]
    %v83 = vld [vmem:[#allocation2 + $0x60] sm:$0xff]
    %v84 = vld [vmem:[#allocation2 + $0x68] sm:$0xff]
    %v85 = vld [vmem:[#allocation2 + $0x70] sm:$0xff]
    %v86 = vld [vmem:[#allocation2 + $0x78] sm:$0xff]
    %v87 = vld [vmem:[#allocation2 + $0x80] sm:$0xff]
    %v88 = vld [vmem:[#allocation2 + $0x88] sm:$0xff]
    %v89 = vld [vmem:[#allocation2 + $0x90] sm:$0xff]
    %v90 = vld [vmem:[#allocation2 + $0x98] sm:$0xff]
    %v91 = vld [vmem:[#allocation2 + $0xa0] sm:$0xff]
    %v92 = vld [vmem:[#allocation2 + $0xa8] sm:$0xff]
    %v93 = vld [vmem:[#allocation2 + $0xb0] sm:$0xff]
    %v94 = vld [vmem:[#allocation2 + $0xb8] sm:$0xff]
    %v95 = vld [vmem:[#allocation2 + $0xc0] sm:$0xff]
    %v96 = vld [vmem:[#allocation2 + $0xc8] sm:$0xff]
    %v97 = vld [vmem:[#allocation2 + $0xd0] sm:$0xff]
    %v98 = vld [vmem:[#allocation2 + $0xd8] sm:$0xff]
    %v99 = vld [vmem:[#allocation2 + $0xe0] sm:$0xff]
    %v100 = vld [vmem:[#allocation2 + $0xe8] sm:$0xff]
    %v101 = vld [vmem:[#allocation2 + $0xf0] sm:$0xff]
    %v102 = vld [vmem:[#allocation2 + $0xf8] sm:$0xff]
    %v103 = vld [vmem:[#allocation2 + $0x100] sm:$0xff]
    %v104 = vld [vmem:[#allocation2 + $0x108] sm:$0xff]
    %v105 = vld [vmem:[#allocation2 + $0x110] sm:$0xff]
    %v106 = vld [vmem:[#allocation2 + $0x118] sm:$0xff]
    %v107 = vld [vmem:[#allocation2 + $0x120] sm:$0xff]
    %v108 = vld [vmem:[#allocation2 + $0x128] sm:$0xff]
    %v109 = vld [vmem:[#allocation2 + $0x130] sm:$0xff]
    %v110 = vld [vmem:[#allocation2 + $0x138] sm:$0xff]
    %v111 = vld [vmem:[#allocation2 + $0x140] sm:$0xff]
    %v112 = vld [vmem:[#allocation2 + $0x148] sm:$0xff]
    %v113 = vld [vmem:[#allocation2 + $0x150] sm:$0xff]
    %v114 = vld [vmem:[#allocation2 + $0x158] sm:$0xff]
    %v115 = vld [vmem:[#allocation2 + $0x160] sm:$0xff]
    %v116 = vld [vmem:[#allocation2 + $0x168] sm:$0xff]
    %v117 = vld [vmem:[#allocation2 + $0x170] sm:$0xff]
    %v118 = vld [vmem:[#allocation2 + $0x178] sm:$0xff]
    %v119 = vld [vmem:[#allocation5] sm:$0xff]
    %v120 = vld [vmem:[#allocation5 + $0x8] sm:$0xff]
    %v121 = vld [vmem:[#allocation5 + $0x10] sm:$0xff]
    %v122 = vld [vmem:[#allocation5 + $0x18] sm:$0xff]
    %v123 = vld [vmem:[#allocation5 + $0x20] sm:$0xff]
    %v124 = vld [vmem:[#allocation5 + $0x28] sm:$0xff]
    %v125 = vld [vmem:[#allocation5 + $0x30] sm:$0xff]
    %v126 = vld [vmem:[#allocation5 + $0x38] sm:$0xff]
    %v127 = vld [vmem:[#allocation5 + $0x40] sm:$0xff]
    %v128 = vld [vmem:[#allocation5 + $0x48] sm:$0xff]
    %v129 = vld [vmem:[#allocation5 + $0x50] sm:$0xff]
    %v130 = vld [vmem:[#allocation5 + $0x58] sm:$0xff]
    %v131 = vld [vmem:[#allocation5 + $0x60] sm:$0xff]
    %v132 = vld [vmem:[#allocation5 + $0x68] sm:$0xff]
    %v133 = vld [vmem:[#allocation5 + $0x70] sm:$0xff]
    %v134 = vld [vmem:[#allocation5 + $0x78] sm:$0xff]
    %v135 = vld [vmem:[#allocation5 + $0x80] sm:$0xff]
    %v136 = vld [vmem:[#allocation5 + $0x88] sm:$0xff]
    %v137 = vld [vmem:[#allocation5 + $0x90] sm:$0xff]
    %v138 = vld [vmem:[#allocation5 + $0x98] sm:$0xff]
    %v139 = vld [vmem:[#allocation5 + $0xa0] sm:$0xff]
    %v140 = vld [vmem:[#allocation5 + $0xa8] sm:$0xff]
    %v141 = vld [vmem:[#allocation5 + $0xb0] sm:$0xff]
    %v142 = vld [vmem:[#allocation5 + $0xb8] sm:$0xff]
    %v143 = vld [vmem:[#allocation5 + $0xc0] sm:$0xff]
    %v144 = vld [vmem:[#allocation5 + $0xc8] sm:$0xff]
    %v145 = vld [vmem:[#allocation5 + $0xd0] sm:$0xff]
    %v146 = vld [vmem:[#allocation5 + $0xd8] sm:$0xff]
    %v147 = vld [vmem:[#allocation5 + $0xe0] sm:$0xff]
    %v148 = vld [vmem:[#allocation5 + $0xe8] sm:$0xff]
    %v149 = vld [vmem:[#allocation5 + $0xf0] sm:$0xff]
    %v150 = vld [vmem:[#allocation5 + $0xf8] sm:$0xff]
    %v151 = vld [vmem:[#allocation7] sm:$0xff]
    %v152 = vld [vmem:[#allocation7 + $0x8] sm:$0xff]
    %v153 = vlaneseq
    %v154 = vshrl.u32 %v153, 7
    %v155 = vsub.s32 0, %v154
    %v156 = vrot.slane %v151, %v155
    %v157 = vlaneseq
    %v158 = vshrl.u32 %v157, 7
    %v159 = vsub.s32 0, %v158
    %v160 = vrot.slane %v152, %v159
    %v209 = vunpack.c.l.b16 %v71
    %v210 = vunpack.c.h.b16 %v71
    %v211 = vunpack.c.l.b16 %v72
    %v212 = vunpack.c.h.b16 %v72
    %v213 = vunpack.c.l.b16 %v73
    %v214 = vunpack.c.h.b16 %v73
    %v215 = vunpack.c.l.b16 %v74
    %v216 = vunpack.c.h.b16 %v74
    %v217 = vunpack.c.l.b16 %v75
    %v218 = vunpack.c.h.b16 %v75
    %v219 = vunpack.c.l.b16 %v76
    %v220 = vunpack.c.h.b16 %v76
    %v221 = vunpack.c.l.b16 %v77
    %v222 = vunpack.c.h.b16 %v77
    %v223 = vunpack.c.l.b16 %v78
    %v224 = vunpack.c.h.b16 %v78
    %v225 = vunpack.c.l.b16 %v79
    %v226 = vunpack.c.h.b16 %v79
    %v227 = vunpack.c.l.b16 %v80
    %v228 = vunpack.c.h.b16 %v80
    %v229 = vunpack.c.l.b16 %v81
    %v230 = vunpack.c.h.b16 %v81
    %v231 = vunpack.c.l.b16 %v82
    %v232 = vunpack.c.h.b16 %v82
    %v233 = vunpack.c.l.b16 %v83
    %v234 = vunpack.c.h.b16 %v83
    %v235 = vunpack.c.l.b16 %v84
    %v236 = vunpack.c.h.b16 %v84
    %v237 = vunpack.c.l.b16 %v85
    %v238 = vunpack.c.h.b16 %v85
    %v239 = vunpack.c.l.b16 %v86
    %v240 = vunpack.c.h.b16 %v86
    %v241 = vunpack.c.l.b16 %v87
    %v242 = vunpack.c.h.b16 %v87
    %v243 = vunpack.c.l.b16 %v88
    %v244 = vunpack.c.h.b16 %v88
    %v245 = vunpack.c.l.b16 %v89
    %v246 = vunpack.c.h.b16 %v89
    %v247 = vunpack.c.l.b16 %v90
    %v248 = vunpack.c.h.b16 %v90
    %v249 = vunpack.c.l.b16 %v91
    %v250 = vunpack.c.h.b16 %v91
    %v251 = vunpack.c.l.b16 %v92
    %v252 = vunpack.c.h.b16 %v92
    %v253 = vunpack.c.l.b16 %v93
    %v254 = vunpack.c.h.b16 %v93
    %v255 = vunpack.c.l.b16 %v94
    %v256 = vunpack.c.h.b16 %v94
    %v257 = vunpack.c.l.b16 %v95
    %v258 = vunpack.c.h.b16 %v95
    %v259 = vunpack.c.l.b16 %v96
    %v260 = vunpack.c.h.b16 %v96
    %v261 = vunpack.c.l.b16 %v97
    %v262 = vunpack.c.h.b16 %v97
    %v263 = vunpack.c.l.b16 %v98
    %v264 = vunpack.c.h.b16 %v98
    %v265 = vunpack.c.l.b16 %v99
    %v266 = vunpack.c.h.b16 %v99
    %v267 = vunpack.c.l.b16 %v100
    %v268 = vunpack.c.h.b16 %v100
    %v269 = vunpack.c.l.b16 %v101
    %v270 = vunpack.c.h.b16 %v101
    %v271 = vunpack.c.l.b16 %v102
    %v272 = vunpack.c.h.b16 %v102
    %v273 = vunpack.c.l.b16 %v103
    %v274 = vunpack.c.h.b16 %v103
    %v275 = vunpack.c.l.b16 %v104
    %v276 = vunpack.c.h.b16 %v104
    %v277 = vunpack.c.l.b16 %v105
    %v278 = vunpack.c.h.b16 %v105
    %v279 = vunpack.c.l.b16 %v106
    %v280 = vunpack.c.h.b16 %v106
    %v281 = vunpack.c.l.b16 %v107
    %v282 = vunpack.c.h.b16 %v107
    %v283 = vunpack.c.l.b16 %v108
    %v284 = vunpack.c.h.b16 %v108
    %v285 = vunpack.c.l.b16 %v109
    %v286 = vunpack.c.h.b16 %v109
    %v287 = vunpack.c.l.b16 %v110
    %v288 = vunpack.c.h.b16 %v110
    %v289 = vunpack.c.l.b16 %v111
    %v290 = vunpack.c.h.b16 %v111
    %v291 = vunpack.c.l.b16 %v112
    %v292 = vunpack.c.h.b16 %v112
    %v293 = vunpack.c.l.b16 %v113
    %v294 = vunpack.c.h.b16 %v113
    %v295 = vunpack.c.l.b16 %v114
    %v296 = vunpack.c.h.b16 %v114
    %v297 = vunpack.c.l.b16 %v115
    %v298 = vunpack.c.h.b16 %v115
    %v299 = vunpack.c.l.b16 %v116
    %v300 = vunpack.c.h.b16 %v116
    %v301 = vunpack.c.l.b16 %v117
    %v302 = vunpack.c.h.b16 %v117
    %v303 = vunpack.c.l.b16 %v118
    %v304 = vunpack.c.h.b16 %v118
    %v305 = vpack.c.b16 %v211, %v209
    %v306 = vpack.c.b16 %v212, %v210
    %v307 = vpack.c.b16 %v215, %v213
    %v308 = vpack.c.b16 %v216, %v214
    %v309 = vpack.c.b16 %v219, %v217
    %v310 = vpack.c.b16 %v220, %v218
    %v311 = vpack.c.b16 %v223, %v221
    %v312 = vpack.c.b16 %v224, %v222
    %v313 = vpack.c.b16 %v227, %v225
    %v314 = vpack.c.b16 %v228, %v226
    %v315 = vpack.c.b16 %v231, %v229
    %v316 = vpack.c.b16 %v232, %v230
    %v317 = vpack.c.b16 %v235, %v233
    %v318 = vpack.c.b16 %v236, %v234
    %v319 = vpack.c.b16 %v239, %v237
    %v320 = vpack.c.b16 %v240, %v238
    %v321 = vpack.c.b16 %v243, %v241
    %v322 = vpack.c.b16 %v244, %v242
    %v323 = vpack.c.b16 %v247, %v245
    %v324 = vpack.c.b16 %v248, %v246
    %v325 = vpack.c.b16 %v251, %v249
    %v326 = vpack.c.b16 %v252, %v250
    %v327 = vpack.c.b16 %v255, %v253
    %v328 = vpack.c.b16 %v256, %v254
    %v329 = vpack.c.b16 %v259, %v257
    %v330 = vpack.c.b16 %v260, %v258
    %v331 = vpack.c.b16 %v263, %v261
    %v332 = vpack.c.b16 %v264, %v262
    %v333 = vpack.c.b16 %v267, %v265
    %v334 = vpack.c.b16 %v268, %v266
    %v335 = vpack.c.b16 %v271, %v269
    %v336 = vpack.c.b16 %v272, %v270
    %v337 = vpack.c.b16 %v275, %v273
    %v338 = vpack.c.b16 %v276, %v274
    %v339 = vpack.c.b16 %v279, %v277
    %v340 = vpack.c.b16 %v280, %v278
    %v341 = vpack.c.b16 %v283, %v281
    %v342 = vpack.c.b16 %v284, %v282
    %v343 = vpack.c.b16 %v287, %v285
    %v344 = vpack.c.b16 %v288, %v286
    %v345 = vpack.c.b16 %v291, %v289
    %v346 = vpack.c.b16 %v292, %v290
    %v347 = vpack.c.b16 %v295, %v293
    %v348 = vpack.c.b16 %v296, %v294
    %v349 = vpack.c.b16 %v299, %v297
    %v350 = vpack.c.b16 %v300, %v298
    %v351 = vpack.c.b16 %v303, %v301
    %v352 = vpack.c.b16 %v304, %v302
    %v433 = vunpack.c.l.b16 %v119
    %v434 = vunpack.c.h.b16 %v119
    %v435 = vunpack.c.l.b16 %v120
    %v436 = vunpack.c.h.b16 %v120
    %v437 = vunpack.c.l.b16 %v121
    %v438 = vunpack.c.h.b16 %v121
    %v439 = vunpack.c.l.b16 %v122
    %v440 = vunpack.c.h.b16 %v122
    %v441 = vunpack.c.l.b16 %v123
    %v442 = vunpack.c.h.b16 %v123
    %v443 = vunpack.c.l.b16 %v124
    %v444 = vunpack.c.h.b16 %v124
    %v445 = vunpack.c.l.b16 %v125
    %v446 = vunpack.c.h.b16 %v125
    %v447 = vunpack.c.l.b16 %v126
    %v448 = vunpack.c.h.b16 %v126
    %v449 = vunpack.c.l.b16 %v127
    %v450 = vunpack.c.h.b16 %v127
    %v451 = vunpack.c.l.b16 %v128
    %v452 = vunpack.c.h.b16 %v128
    %v453 = vunpack.c.l.b16 %v129
    %v454 = vunpack.c.h.b16 %v129
    %v455 = vunpack.c.l.b16 %v130
    %v456 = vunpack.c.h.b16 %v130
    %v457 = vunpack.c.l.b16 %v131
    %v458 = vunpack.c.h.b16 %v131
    %v459 = vunpack.c.l.b16 %v132
    %v460 = vunpack.c.h.b16 %v132
    %v461 = vunpack.c.l.b16 %v133
    %v462 = vunpack.c.h.b16 %v133
    %v463 = vunpack.c.l.b16 %v134
    %v464 = vunpack.c.h.b16 %v134
    %v465 = vunpack.c.l.b16 %v135
    %v466 = vunpack.c.h.b16 %v135
    %v467 = vunpack.c.l.b16 %v136
    %v468 = vunpack.c.h.b16 %v136
    %v469 = vunpack.c.l.b16 %v137
    %v470 = vunpack.c.h.b16 %v137
    %v471 = vunpack.c.l.b16 %v138
    %v472 = vunpack.c.h.b16 %v138
    %v473 = vunpack.c.l.b16 %v139
    %v474 = vunpack.c.h.b16 %v139
    %v475 = vunpack.c.l.b16 %v140
    %v476 = vunpack.c.h.b16 %v140
    %v477 = vunpack.c.l.b16 %v141
    %v478 = vunpack.c.h.b16 %v141
    %v479 = vunpack.c.l.b16 %v142
    %v480 = vunpack.c.h.b16 %v142
    %v481 = vunpack.c.l.b16 %v143
    %v482 = vunpack.c.h.b16 %v143
    %v483 = vunpack.c.l.b16 %v144
    %v484 = vunpack.c.h.b16 %v144
    %v485 = vunpack.c.l.b16 %v145
    %v486 = vunpack.c.h.b16 %v145
    %v487 = vunpack.c.l.b16 %v146
    %v488 = vunpack.c.h.b16 %v146
    %v489 = vunpack.c.l.b16 %v147
    %v490 = vunpack.c.h.b16 %v147
    %v491 = vunpack.c.l.b16 %v148
    %v492 = vunpack.c.h.b16 %v148
    %v493 = vunpack.c.l.b16 %v149
    %v494 = vunpack.c.h.b16 %v149
    %v495 = vunpack.c.l.b16 %v150
    %v496 = vunpack.c.h.b16 %v150
    %v497 = vpack.c.b16 %v435, %v433
    %v498 = vpack.c.b16 %v436, %v434
    %v499 = vpack.c.b16 %v439, %v437
    %v500 = vpack.c.b16 %v440, %v438
    %v501 = vpack.c.b16 %v443, %v441
    %v502 = vpack.c.b16 %v444, %v442
    %v503 = vpack.c.b16 %v447, %v445
    %v504 = vpack.c.b16 %v448, %v446
    %v505 = vpack.c.b16 %v451, %v449
    %v506 = vpack.c.b16 %v452, %v450
    %v507 = vpack.c.b16 %v455, %v453
    %v508 = vpack.c.b16 %v456, %v454
    %v509 = vpack.c.b16 %v459, %v457
    %v510 = vpack.c.b16 %v460, %v458
    %v511 = vpack.c.b16 %v463, %v461
    %v512 = vpack.c.b16 %v464, %v462
    %v513 = vpack.c.b16 %v467, %v465
    %v514 = vpack.c.b16 %v468, %v466
    %v515 = vpack.c.b16 %v471, %v469
    %v516 = vpack.c.b16 %v472, %v470
    %v517 = vpack.c.b16 %v475, %v473
    %v518 = vpack.c.b16 %v476, %v474
    %v519 = vpack.c.b16 %v479, %v477
    %v520 = vpack.c.b16 %v480, %v478
    %v521 = vpack.c.b16 %v483, %v481
    %v522 = vpack.c.b16 %v484, %v482
    %v523 = vpack.c.b16 %v487, %v485
    %v524 = vpack.c.b16 %v488, %v486
    %v525 = vpack.c.b16 %v491, %v489
    %v526 = vpack.c.b16 %v492, %v490
    %v527 = vpack.c.b16 %v495, %v493
    %v528 = vpack.c.b16 %v496, %v494
    %561 = vmatprep.subr.bf16.mxu0 %v498
    %562 = vmatpush1.bf16.msra.mxu0 %v497
    %563 = vmatprep.subr.bf16.mxu0 %v500
    %564 = vmatpush1.bf16.msra.mxu0 %v499
    %565 = vmatprep.subr.bf16.mxu0 %v502
    %566 = vmatpush1.bf16.msra.mxu0 %v501
    %567 = vmatprep.subr.bf16.mxu0 %v504
    %568 = vmatpush1.bf16.msra.mxu0 %v503
    %569 = vmatprep.subr.bf16.mxu0 %v506
    %570 = vmatpush1.bf16.msra.mxu0 %v505
    %571 = vmatprep.subr.bf16.mxu0 %v508
    %572 = vmatpush1.bf16.msra.mxu0 %v507
    %573 = vmatprep.subr.bf16.mxu0 %v510
    %574 = vmatpush1.bf16.msra.mxu0 %v509
    %575 = vmatprep.subr.bf16.mxu0 %v512
    %576 = vmatpush1.bf16.msra.mxu0 %v511
    %577 = vmatprep.subr.bf16.mxu0 %v514
    %578 = vmatpush1.bf16.msra.mxu0 %v513
    %579 = vmatprep.subr.bf16.mxu0 %v516
    %580 = vmatpush1.bf16.msra.mxu0 %v515
    %581 = vmatprep.subr.bf16.mxu0 %v518
    %582 = vmatpush1.bf16.msra.mxu0 %v517
    %583 = vmatprep.subr.bf16.mxu0 %v520
    %584 = vmatpush1.bf16.msra.mxu0 %v519
    %585 = vmatprep.subr.bf16.mxu0 %v522
    %586 = vmatpush1.bf16.msra.mxu0 %v521
    %587 = vmatprep.subr.bf16.mxu0 %v524
    %588 = vmatpush1.bf16.msra.mxu0 %v523
    %589 = vmatprep.subr.bf16.mxu0 %v526
    %590 = vmatpush1.bf16.msra.mxu0 %v525
    %591 = vmatprep.subr.bf16.mxu0 %v528
    %592 = vmatpush1.bf16.msra.mxu0 %v527
    %593 = vmatprep.mubr.bf16.mxu0 %v306
    %594 = vmatmul.mubr.bf16.gmra.mrb[0].mxu0 %v305
    %v595 = vpop.f32.mrb[0].mxu0
    %v596 = vadd.f32 %v156, %v595
    %v597 = vpop.f32.mrb[0].mxu0
    %v598 = vadd.f32 %v160, %v597
    %v599 = vpop.f32.mrb[0].mxu0
    %v600 = vadd.f32 %v156, %v599
    %v601 = vpop.f32.mrb[0].mxu0
    %v602 = vadd.f32 %v160, %v601
    %603 = vmatprep.mubr.bf16.mxu0 %v308
    %604 = vmatmul.mubr.bf16.gmra.mrb[0].mxu0 %v307
    %v605 = vpop.f32.mrb[0].mxu0
    %v606 = vadd.f32 %v156, %v605
    %v607 = vpop.f32.mrb[0].mxu0
    %v608 = vadd.f32 %v160, %v607
    %v609 = vpop.f32.mrb[0].mxu0
    %v610 = vadd.f32 %v156, %v609
    %v611 = vpop.f32.mrb[0].mxu0
    %v612 = vadd.f32 %v160, %v611
    %613 = vmatprep.mubr.bf16.mxu0 %v310
    %614 = vmatmul.mubr.bf16.gmra.mrb[0].mxu0 %v309
    %v615 = vpop.f32.mrb[0].mxu0
    %v616 = vadd.f32 %v156, %v615
    %v617 = vpop.f32.mrb[0].mxu0
    %v618 = vadd.f32 %v160, %v617
    %v619 = vpop.f32.mrb[0].mxu0
    %v620 = vadd.f32 %v156, %v619
    %v621 = vpop.f32.mrb[0].mxu0
    %v622 = vadd.f32 %v160, %v621
    %623 = vmatprep.mubr.bf16.mxu0 %v312
    %624 = vmatmul.mubr.bf16.gmra.mrb[0].mxu0 %v311
    %v625 = vpop.f32.mrb[0].mxu0
    %v626 = vadd.f32 %v156, %v625
    %v627 = vpop.f32.mrb[0].mxu0
    %v628 = vadd.f32 %v160, %v627
    %v629 = vpop.f32.mrb[0].mxu0
    %v630 = vadd.f32 %v156, %v629
    %v631 = vpop.f32.mrb[0].mxu0
    %v632 = vadd.f32 %v160, %v631
    %633 = vmatprep.mubr.bf16.mxu0 %v314
    %634 = vmatmul.mubr.bf16.gmra.mrb[0].mxu0 %v313
    %v635 = vpop.f32.mrb[0].mxu0
    %v636 = vadd.f32 %v156, %v635
    %v637 = vpop.f32.mrb[0].mxu0
    %v638 = vadd.f32 %v160, %v637
    %v639 = vpop.f32.mrb[0].mxu0
    %v640 = vadd.f32 %v156, %v639
    %v641 = vpop.f32.mrb[0].mxu0
    %v642 = vadd.f32 %v160, %v641
    %643 = vmatprep.mubr.bf16.mxu0 %v316
    %644 = vmatmul.mubr.bf16.gmra.mrb[0].mxu0 %v315
    %v645 = vpop.f32.mrb[0].mxu0
    %v646 = vadd.f32 %v156, %v645
    %v647 = vpop.f32.mrb[0].mxu0
    %v648 = vadd.f32 %v160, %v647
    %v649 = vpop.f32.mrb[0].mxu0
    %v650 = vadd.f32 %v156, %v649
    %v651 = vpop.f32.mrb[0].mxu0
    %v652 = vadd.f32 %v160, %v651
    %653 = vmatprep.mubr.bf16.mxu0 %v318
    %654 = vmatmul.mubr.bf16.gmra.mrb[0].mxu0 %v317
    %v655 = vpop.f32.mrb[0].mxu0
    %v656 = vadd.f32 %v156, %v655
    %v657 = vpop.f32.mrb[0].mxu0
    %v658 = vadd.f32 %v160, %v657
    %v659 = vpop.f32.mrb[0].mxu0
    %v660 = vadd.f32 %v156, %v659
    %v661 = vpop.f32.mrb[0].mxu0
    %v662 = vadd.f32 %v160, %v661
    %663 = vmatprep.mubr.bf16.mxu0 %v320
    %664 = vmatmul.mubr.bf16.gmra.mrb[0].mxu0 %v319
    %v665 = vpop.f32.mrb[0].mxu0
    %v666 = vadd.f32 %v156, %v665
    %v667 = vpop.f32.mrb[0].mxu0
    %v668 = vadd.f32 %v160, %v667
    %v669 = vpop.f32.mrb[0].mxu0
    %v670 = vadd.f32 %v156, %v669
    %v671 = vpop.f32.mrb[0].mxu0
    %v672 = vadd.f32 %v160, %v671
    %673 = vmatprep.mubr.bf16.mxu0 %v322
    %674 = vmatmul.mubr.bf16.gmra.mrb[0].mxu0 %v321
    %v675 = vpop.f32.mrb[0].mxu0
    %v676 = vadd.f32 %v156, %v675
    %v677 = vpop.f32.mrb[0].mxu0
    %v678 = vadd.f32 %v160, %v677
    %v679 = vpop.f32.mrb[0].mxu0
    %v680 = vadd.f32 %v156, %v679
    %v681 = vpop.f32.mrb[0].mxu0
    %v682 = vadd.f32 %v160, %v681
    %683 = vmatprep.mubr.bf16.mxu0 %v324
    %684 = vmatmul.mubr.bf16.gmra.mrb[0].mxu0 %v323
    %v685 = vpop.f32.mrb[0].mxu0
    %v686 = vadd.f32 %v156, %v685
    %v687 = vpop.f32.mrb[0].mxu0
    %v688 = vadd.f32 %v160, %v687
    %v689 = vpop.f32.mrb[0].mxu0
    %v690 = vadd.f32 %v156, %v689
    %v691 = vpop.f32.mrb[0].mxu0
    %v692 = vadd.f32 %v160, %v691
    %693 = vmatprep.mubr.bf16.mxu0 %v326
    %694 = vmatmul.mubr.bf16.gmra.mrb[0].mxu0 %v325
    %v695 = vpop.f32.mrb[0].mxu0
    %v696 = vadd.f32 %v156, %v695
    %v697 = vpop.f32.mrb[0].mxu0
    %v698 = vadd.f32 %v160, %v697
    %v699 = vpop.f32.mrb[0].mxu0
    %v700 = vadd.f32 %v156, %v699
    %v701 = vpop.f32.mrb[0].mxu0
    %v702 = vadd.f32 %v160, %v701
    %703 = vmatprep.mubr.bf16.mxu0 %v328
    %704 = vmatmul.mubr.bf16.gmra.mrb[0].mxu0 %v327
    %v705 = vpop.f32.mrb[0].mxu0
    %v706 = vadd.f32 %v156, %v705
    %v707 = vpop.f32.mrb[0].mxu0
    %v708 = vadd.f32 %v160, %v707
    %v709 = vpop.f32.mrb[0].mxu0
    %v710 = vadd.f32 %v156, %v709
    %v711 = vpop.f32.mrb[0].mxu0
    %v712 = vadd.f32 %v160, %v711
    %713 = vmatprep.mubr.bf16.mxu0 %v330
    %714 = vmatmul.mubr.bf16.gmra.mrb[0].mxu0 %v329
    %v715 = vpop.f32.mrb[0].mxu0
    %v716 = vadd.f32 %v156, %v715
    %v717 = vpop.f32.mrb[0].mxu0
    %v718 = vadd.f32 %v160, %v717
    %v719 = vpop.f32.mrb[0].mxu0
    %v720 = vadd.f32 %v156, %v719
    %v721 = vpop.f32.mrb[0].mxu0
    %v722 = vadd.f32 %v160, %v721
    %723 = vmatprep.mubr.bf16.mxu0 %v332
    %724 = vmatmul.mubr.bf16.gmra.mrb[0].mxu0 %v331
    %v725 = vpop.f32.mrb[0].mxu0
    %v726 = vadd.f32 %v156, %v725
    %v727 = vpop.f32.mrb[0].mxu0
    %v728 = vadd.f32 %v160, %v727
    %v729 = vpop.f32.mrb[0].mxu0
    %v730 = vadd.f32 %v156, %v729
    %v731 = vpop.f32.mrb[0].mxu0
    %v732 = vadd.f32 %v160, %v731
    %733 = vmatprep.mubr.bf16.mxu0 %v334
    %734 = vmatmul.mubr.bf16.gmra.mrb[0].mxu0 %v333
    %v735 = vpop.f32.mrb[0].mxu0
    %v736 = vadd.f32 %v156, %v735
    %v737 = vpop.f32.mrb[0].mxu0
    %v738 = vadd.f32 %v160, %v737
    %v739 = vpop.f32.mrb[0].mxu0
    %v740 = vadd.f32 %v156, %v739
    %v741 = vpop.f32.mrb[0].mxu0
    %v742 = vadd.f32 %v160, %v741
    %743 = vmatprep.mubr.bf16.mxu0 %v336
    %744 = vmatmul.mubr.bf16.gmra.mrb[0].mxu0 %v335
    %v745 = vpop.f32.mrb[0].mxu0
    %v746 = vadd.f32 %v156, %v745
    %v747 = vpop.f32.mrb[0].mxu0
    %v748 = vadd.f32 %v160, %v747
    %v749 = vpop.f32.mrb[0].mxu0
    %v750 = vadd.f32 %v156, %v749
    %v751 = vpop.f32.mrb[0].mxu0
    %v752 = vadd.f32 %v160, %v751
    %753 = vmatprep.mubr.bf16.mxu0 %v338
    %754 = vmatmul.mubr.bf16.gmra.mrb[0].mxu0 %v337
    %v755 = vpop.f32.mrb[0].mxu0
    %v756 = vadd.f32 %v156, %v755
    %v757 = vpop.f32.mrb[0].mxu0
    %v758 = vadd.f32 %v160, %v757
    %v759 = vpop.f32.mrb[0].mxu0
    %v760 = vadd.f32 %v156, %v759
    %v761 = vpop.f32.mrb[0].mxu0
    %v762 = vadd.f32 %v160, %v761
    %763 = vmatprep.mubr.bf16.mxu0 %v340
    %764 = vmatmul.mubr.bf16.gmra.mrb[0].mxu0 %v339
    %v765 = vpop.f32.mrb[0].mxu0
    %v766 = vadd.f32 %v156, %v765
    %v767 = vpop.f32.mrb[0].mxu0
    %v768 = vadd.f32 %v160, %v767
    %v769 = vpop.f32.mrb[0].mxu0
    %v770 = vadd.f32 %v156, %v769
    %v771 = vpop.f32.mrb[0].mxu0
    %v772 = vadd.f32 %v160, %v771
    %773 = vmatprep.mubr.bf16.mxu0 %v342
    %774 = vmatmul.mubr.bf16.gmra.mrb[0].mxu0 %v341
    %v775 = vpop.f32.mrb[0].mxu0
    %v776 = vadd.f32 %v156, %v775
    %v777 = vpop.f32.mrb[0].mxu0
    %v778 = vadd.f32 %v160, %v777
    %v779 = vpop.f32.mrb[0].mxu0
    %v780 = vadd.f32 %v156, %v779
    %v781 = vpop.f32.mrb[0].mxu0
    %v782 = vadd.f32 %v160, %v781
    %783 = vmatprep.mubr.bf16.mxu0 %v344
    %784 = vmatmul.mubr.bf16.gmra.mrb[0].mxu0 %v343
    %v785 = vpop.f32.mrb[0].mxu0
    %v786 = vadd.f32 %v156, %v785
    %v787 = vpop.f32.mrb[0].mxu0
    %v788 = vadd.f32 %v160, %v787
    %v789 = vpop.f32.mrb[0].mxu0
    %v790 = vadd.f32 %v156, %v789
    %v791 = vpop.f32.mrb[0].mxu0
    %v792 = vadd.f32 %v160, %v791
    %793 = vmatprep.mubr.bf16.mxu0 %v346
    %794 = vmatmul.mubr.bf16.gmra.mrb[0].mxu0 %v345
    %v795 = vpop.f32.mrb[0].mxu0
    %v796 = vadd.f32 %v156, %v795
    %v797 = vpop.f32.mrb[0].mxu0
    %v798 = vadd.f32 %v160, %v797
    %v799 = vpop.f32.mrb[0].mxu0
    %v800 = vadd.f32 %v156, %v799
    %v801 = vpop.f32.mrb[0].mxu0
    %v802 = vadd.f32 %v160, %v801
    %803 = vmatprep.mubr.bf16.mxu0 %v348
    %804 = vmatmul.mubr.bf16.gmra.mrb[0].mxu0 %v347
    %v805 = vpop.f32.mrb[0].mxu0
    %v806 = vadd.f32 %v156, %v805
    %v807 = vpop.f32.mrb[0].mxu0
    %v808 = vadd.f32 %v160, %v807
    %v809 = vpop.f32.mrb[0].mxu0
    %v810 = vadd.f32 %v156, %v809
    %v811 = vpop.f32.mrb[0].mxu0
    %v812 = vadd.f32 %v160, %v811
    %813 = vmatprep.mubr.bf16.mxu0 %v350
    %814 = vmatmul.mubr.bf16.gmra.mrb[0].mxu0 %v349
    %v815 = vpop.f32.mrb[0].mxu0
    %v816 = vadd.f32 %v156, %v815
    %v817 = vpop.f32.mrb[0].mxu0
    %v818 = vadd.f32 %v160, %v817
    %v819 = vpop.f32.mrb[0].mxu0
    %v820 = vadd.f32 %v156, %v819
    %v821 = vpop.f32.mrb[0].mxu0
    %v822 = vadd.f32 %v160, %v821
    %823 = vmatprep.mubr.bf16.mxu0 %v352
    %824 = vmatmul.mubr.bf16.gmra.mrb[0].mxu0 %v351
    %v825 = vpop.f32.mrb[0].mxu0
    %v826 = vadd.f32 %v156, %v825
    %v827 = vpop.f32.mrb[0].mxu0
    %v828 = vadd.f32 %v160, %v827
    %v829 = vpop.f32.mrb[0].mxu0
    %v830 = vadd.f32 %v156, %v829
    %v831 = vpop.f32.mrb[0].mxu0
    %v832 = vadd.f32 %v160, %v831
    %833 = vdwg.mxu0
    %v834 = vld [vmem:[#allocation8] sm:$0xff]
    %v835 = vld [vmem:[#allocation8 + $0x8] sm:$0xff]
    %v836 = vld [vmem:[#allocation8 + $0x10] sm:$0xff]
    %v837 = vld [vmem:[#allocation8 + $0x18] sm:$0xff]
    %v838 = vld [vmem:[#allocation8 + $0x20] sm:$0xff]
    %v839 = vld [vmem:[#allocation8 + $0x28] sm:$0xff]
    %v840 = vld [vmem:[#allocation8 + $0x30] sm:$0xff]
    %v841 = vld [vmem:[#allocation8 + $0x38] sm:$0xff]
    %v842 = vld [vmem:[#allocation8 + $0x40] sm:$0xff]
    %v843 = vld [vmem:[#allocation8 + $0x48] sm:$0xff]
    %v844 = vld [vmem:[#allocation8 + $0x50] sm:$0xff]
    %v845 = vld [vmem:[#allocation8 + $0x58] sm:$0xff]
    %v846 = vld [vmem:[#allocation8 + $0x60] sm:$0xff]
    %v847 = vld [vmem:[#allocation8 + $0x68] sm:$0xff]
    %v848 = vld [vmem:[#allocation8 + $0x70] sm:$0xff]
    %v849 = vld [vmem:[#allocation8 + $0x78] sm:$0xff]
    %v850 = vld [vmem:[#allocation8 + $0x80] sm:$0xff]
    %v851 = vld [vmem:[#allocation8 + $0x88] sm:$0xff]
    %v852 = vld [vmem:[#allocation8 + $0x90] sm:$0xff]
    %v853 = vld [vmem:[#allocation8 + $0x98] sm:$0xff]
    %v854 = vld [vmem:[#allocation8 + $0xa0] sm:$0xff]
    %v855 = vld [vmem:[#allocation8 + $0xa8] sm:$0xff]
    %v856 = vld [vmem:[#allocation8 + $0xb0] sm:$0xff]
    %v857 = vld [vmem:[#allocation8 + $0xb8] sm:$0xff]
    %v858 = vld [vmem:[#allocation8 + $0xc0] sm:$0xff]
    %v859 = vld [vmem:[#allocation8 + $0xc8] sm:$0xff]
    %v860 = vld [vmem:[#allocation8 + $0xd0] sm:$0xff]
    %v861 = vld [vmem:[#allocation8 + $0xd8] sm:$0xff]
    %v862 = vld [vmem:[#allocation8 + $0xe0] sm:$0xff]
    %v863 = vld [vmem:[#allocation8 + $0xe8] sm:$0xff]
    %v864 = vld [vmem:[#allocation8 + $0xf0] sm:$0xff]
    %v865 = vld [vmem:[#allocation8 + $0xf8] sm:$0xff]
    %v866 = vld [vmem:[#allocation8 + $0x100] sm:$0xff]
    %v867 = vld [vmem:[#allocation8 + $0x108] sm:$0xff]
    %v868 = vld [vmem:[#allocation8 + $0x110] sm:$0xff]
    %v869 = vld [vmem:[#allocation8 + $0x118] sm:$0xff]
    %v870 = vld [vmem:[#allocation8 + $0x120] sm:$0xff]
    %v871 = vld [vmem:[#allocation8 + $0x128] sm:$0xff]
    %v872 = vld [vmem:[#allocation8 + $0x130] sm:$0xff]
    %v873 = vld [vmem:[#allocation8 + $0x138] sm:$0xff]
    %v874 = vld [vmem:[#allocation8 + $0x140] sm:$0xff]
    %v875 = vld [vmem:[#allocation8 + $0x148] sm:$0xff]
    %v876 = vld [vmem:[#allocation8 + $0x150] sm:$0xff]
    %v877 = vld [vmem:[#allocation8 + $0x158] sm:$0xff]
    %v878 = vld [vmem:[#allocation8 + $0x160] sm:$0xff]
    %v879 = vld [vmem:[#allocation8 + $0x168] sm:$0xff]
    %v880 = vld [vmem:[#allocation8 + $0x170] sm:$0xff]
    %v881 = vld [vmem:[#allocation8 + $0x178] sm:$0xff]
    %v882 = vld [vmem:[#allocation8 + $0x180] sm:$0xff]
    %v883 = vld [vmem:[#allocation8 + $0x188] sm:$0xff]
    %v884 = vld [vmem:[#allocation8 + $0x190] sm:$0xff]
    %v885 = vld [vmem:[#allocation8 + $0x198] sm:$0xff]
    %v886 = vld [vmem:[#allocation8 + $0x1a0] sm:$0xff]
    %v887 = vld [vmem:[#allocation8 + $0x1a8] sm:$0xff]
    %v888 = vld [vmem:[#allocation8 + $0x1b0] sm:$0xff]
    %v889 = vld [vmem:[#allocation8 + $0x1b8] sm:$0xff]
    %v890 = vld [vmem:[#allocation8 + $0x1c0] sm:$0xff]
    %v891 = vld [vmem:[#allocation8 + $0x1c8] sm:$0xff]
    %v892 = vld [vmem:[#allocation8 + $0x1d0] sm:$0xff]
    %v893 = vld [vmem:[#allocation8 + $0x1d8] sm:$0xff]
    %v894 = vld [vmem:[#allocation8 + $0x1e0] sm:$0xff]
    %v895 = vld [vmem:[#allocation8 + $0x1e8] sm:$0xff]
    %v896 = vld [vmem:[#allocation8 + $0x1f0] sm:$0xff]
    %v897 = vld [vmem:[#allocation8 + $0x1f8] sm:$0xff]
    %v898 = vld [vmem:[#allocation8 + $0x200] sm:$0xff]
    %v899 = vld [vmem:[#allocation8 + $0x208] sm:$0xff]
    %v900 = vld [vmem:[#allocation8 + $0x210] sm:$0xff]
    %v901 = vld [vmem:[#allocation8 + $0x218] sm:$0xff]
    %v902 = vld [vmem:[#allocation8 + $0x220] sm:$0xff]
    %v903 = vld [vmem:[#allocation8 + $0x228] sm:$0xff]
    %v904 = vld [vmem:[#allocation8 + $0x230] sm:$0xff]
    %v905 = vld [vmem:[#allocation8 + $0x238] sm:$0xff]
    %v906 = vld [vmem:[#allocation8 + $0x240] sm:$0xff]
    %v907 = vld [vmem:[#allocation8 + $0x248] sm:$0xff]
    %v908 = vld [vmem:[#allocation8 + $0x250] sm:$0xff]
    %v909 = vld [vmem:[#allocation8 + $0x258] sm:$0xff]
    %v910 = vld [vmem:[#allocation8 + $0x260] sm:$0xff]
    %v911 = vld [vmem:[#allocation8 + $0x268] sm:$0xff]
    %v912 = vld [vmem:[#allocation8 + $0x270] sm:$0xff]
    %v913 = vld [vmem:[#allocation8 + $0x278] sm:$0xff]
    %v914 = vld [vmem:[#allocation8 + $0x280] sm:$0xff]
    %v915 = vld [vmem:[#allocation8 + $0x288] sm:$0xff]
    %v916 = vld [vmem:[#allocation8 + $0x290] sm:$0xff]
    %v917 = vld [vmem:[#allocation8 + $0x298] sm:$0xff]
    %v918 = vld [vmem:[#allocation8 + $0x2a0] sm:$0xff]
    %v919 = vld [vmem:[#allocation8 + $0x2a8] sm:$0xff]
    %v920 = vld [vmem:[#allocation8 + $0x2b0] sm:$0xff]
    %v921 = vld [vmem:[#allocation8 + $0x2b8] sm:$0xff]
    %v922 = vld [vmem:[#allocation8 + $0x2c0] sm:$0xff]
    %v923 = vld [vmem:[#allocation8 + $0x2c8] sm:$0xff]
    %v924 = vld [vmem:[#allocation8 + $0x2d0] sm:$0xff]
    %v925 = vld [vmem:[#allocation8 + $0x2d8] sm:$0xff]
    %v926 = vld [vmem:[#allocation8 + $0x2e0] sm:$0xff]
    %v927 = vld [vmem:[#allocation8 + $0x2e8] sm:$0xff]
    %v928 = vld [vmem:[#allocation8 + $0x2f0] sm:$0xff]
    %v929 = vld [vmem:[#allocation8 + $0x2f8] sm:$0xff]
    %v930 = vadd.f32 %v596, %v834
    %v931 = vadd.f32 %v598, %v835
    %v932 = vadd.f32 %v600, %v836
    %v933 = vadd.f32 %v602, %v837
    %v934 = vadd.f32 %v606, %v838
    %v935 = vadd.f32 %v608, %v839
    %v936 = vadd.f32 %v610, %v840
    %v937 = vadd.f32 %v612, %v841
    %v938 = vadd.f32 %v616, %v842
    %v939 = vadd.f32 %v618, %v843
    %v940 = vadd.f32 %v620, %v844
    %v941 = vadd.f32 %v622, %v845
    %v942 = vadd.f32 %v626, %v846
    %v943 = vadd.f32 %v628, %v847
    %v944 = vadd.f32 %v630, %v848
    %v945 = vadd.f32 %v632, %v849
    %v946 = vadd.f32 %v636, %v850
    %v947 = vadd.f32 %v638, %v851
    %v948 = vadd.f32 %v640, %v852
    %v949 = vadd.f32 %v642, %v853
    %v950 = vadd.f32 %v646, %v854
    %v951 = vadd.f32 %v648, %v855
    %v952 = vadd.f32 %v650, %v856
    %v953 = vadd.f32 %v652, %v857
    %v954 = vadd.f32 %v656, %v858
    %v955 = vadd.f32 %v658, %v859
    %v956 = vadd.f32 %v660, %v860
    %v957 = vadd.f32 %v662, %v861
    %v958 = vadd.f32 %v666, %v862
    %v959 = vadd.f32 %v668, %v863
    %v960 = vadd.f32 %v670, %v864
    %v961 = vadd.f32 %v672, %v865
    %v962 = vadd.f32 %v676, %v866
    %v963 = vadd.f32 %v678, %v867
    %v964 = vadd.f32 %v680, %v868
    %v965 = vadd.f32 %v682, %v869
    %v966 = vadd.f32 %v686, %v870
    %v967 = vadd.f32 %v688, %v871
    %v968 = vadd.f32 %v690, %v872
    %v969 = vadd.f32 %v692, %v873
    %v970 = vadd.f32 %v696, %v874
    %v971 = vadd.f32 %v698, %v875
    %v972 = vadd.f32 %v700, %v876
    %v973 = vadd.f32 %v702, %v877
    %v974 = vadd.f32 %v706, %v878
    %v975 = vadd.f32 %v708, %v879
    %v976 = vadd.f32 %v710, %v880
    %v977 = vadd.f32 %v712, %v881
    %v978 = vadd.f32 %v716, %v882
    %v979 = vadd.f32 %v718, %v883
    %v980 = vadd.f32 %v720, %v884
    %v981 = vadd.f32 %v722, %v885
    %v982 = vadd.f32 %v726, %v886
    %v983 = vadd.f32 %v728, %v887
    %v984 = vadd.f32 %v730, %v888
    %v985 = vadd.f32 %v732, %v889
    %v986 = vadd.f32 %v736, %v890
    %v987 = vadd.f32 %v738, %v891
    %v988 = vadd.f32 %v740, %v892
    %v989 = vadd.f32 %v742, %v893
    %v990 = vadd.f32 %v746, %v894
    %v991 = vadd.f32 %v748, %v895
    %v992 = vadd.f32 %v750, %v896
    %v993 = vadd.f32 %v752, %v897
    %v994 = vadd.f32 %v756, %v898
    %v995 = vadd.f32 %v758, %v899
    %v996 = vadd.f32 %v760, %v900
    %v997 = vadd.f32 %v762, %v901
    %v998 = vadd.f32 %v766, %v902
    %v999 = vadd.f32 %v768, %v903
    %v1000 = vadd.f32 %v770, %v904
    %v1001 = vadd.f32 %v772, %v905
    %v1002 = vadd.f32 %v776, %v906
    %v1003 = vadd.f32 %v778, %v907
    %v1004 = vadd.f32 %v780, %v908
    %v1005 = vadd.f32 %v782, %v909
    %v1006 = vadd.f32 %v786, %v910
    %v1007 = vadd.f32 %v788, %v911
    %v1008 = vadd.f32 %v790, %v912
    %v1009 = vadd.f32 %v792, %v913
    %v1010 = vadd.f32 %v796, %v914
    %v1011 = vadd.f32 %v798, %v915
    %v1012 = vadd.f32 %v800, %v916
    %v1013 = vadd.f32 %v802, %v917
    %v1014 = vadd.f32 %v806, %v918
    %v1015 = vadd.f32 %v808, %v919
    %v1016 = vadd.f32 %v810, %v920
    %v1017 = vadd.f32 %v812, %v921
    %v1018 = vadd.f32 %v816, %v922
    %v1019 = vadd.f32 %v818, %v923
    %v1020 = vadd.f32 %v820, %v924
    %v1021 = vadd.f32 %v822, %v925
    %v1022 = vadd.f32 %v826, %v926
    %v1023 = vadd.f32 %v828, %v927
    %v1024 = vadd.f32 %v830, %v928
    %v1025 = vadd.f32 %v832, %v929
    %v1026 = vadd.f32 %v930, %v931
    %1027 = vadd.xlane.f32.xlu0 %v1026
    %v1028 = vpop.xlane.xlu0 %1027
    %v1029 = vadd.f32 %v932, %v933
    %1030 = vadd.xlane.f32.xlu0 %v1029
    %v1031 = vpop.xlane.xlu0 %1030
    %v1032 = vadd.f32 %v934, %v935
    %1033 = vadd.xlane.f32.xlu0 %v1032
    %v1034 = vpop.xlane.xlu0 %1033
    %v1035 = vadd.f32 %v936, %v937
    %1036 = vadd.xlane.f32.xlu0 %v1035
    %v1037 = vpop.xlane.xlu0 %1036
    %v1038 = vadd.f32 %v938, %v939
    %1039 = vadd.xlane.f32.xlu0 %v1038
    %v1040 = vpop.xlane.xlu0 %1039
    %v1041 = vadd.f32 %v940, %v941
    %1042 = vadd.xlane.f32.xlu0 %v1041
    %v1043 = vpop.xlane.xlu0 %1042
    %v1044 = vadd.f32 %v942, %v943
    %1045 = vadd.xlane.f32.xlu0 %v1044
    %v1046 = vpop.xlane.xlu0 %1045
    %v1047 = vadd.f32 %v944, %v945
    %1048 = vadd.xlane.f32.xlu0 %v1047
    %v1049 = vpop.xlane.xlu0 %1048
    %v1050 = vadd.f32 %v946, %v947
    %1051 = vadd.xlane.f32.xlu0 %v1050
    %v1052 = vpop.xlane.xlu0 %1051
    %v1053 = vadd.f32 %v948, %v949
    %1054 = vadd.xlane.f32.xlu0 %v1053
    %v1055 = vpop.xlane.xlu0 %1054
    %v1056 = vadd.f32 %v950, %v951
    %1057 = vadd.xlane.f32.xlu0 %v1056
    %v1058 = vpop.xlane.xlu0 %1057
    %v1059 = vadd.f32 %v952, %v953
    %1060 = vadd.xlane.f32.xlu0 %v1059
    %v1061 = vpop.xlane.xlu0 %1060
    %v1062 = vadd.f32 %v954, %v955
    %1063 = vadd.xlane.f32.xlu0 %v1062
    %v1064 = vpop.xlane.xlu0 %1063
    %v1065 = vadd.f32 %v956, %v957
    %1066 = vadd.xlane.f32.xlu0 %v1065
    %v1067 = vpop.xlane.xlu0 %1066
    %v1068 = vadd.f32 %v958, %v959
    %1069 = vadd.xlane.f32.xlu0 %v1068
    %v1070 = vpop.xlane.xlu0 %1069
    %v1071 = vadd.f32 %v960, %v961
    %1072 = vadd.xlane.f32.xlu0 %v1071
    %v1073 = vpop.xlane.xlu0 %1072
    %v1074 = vadd.f32 %v962, %v963
    %1075 = vadd.xlane.f32.xlu0 %v1074
    %v1076 = vpop.xlane.xlu0 %1075
    %v1077 = vadd.f32 %v964, %v965
    %1078 = vadd.xlane.f32.xlu0 %v1077
    %v1079 = vpop.xlane.xlu0 %1078
    %v1080 = vadd.f32 %v966, %v967
    %1081 = vadd.xlane.f32.xlu0 %v1080
    %v1082 = vpop.xlane.xlu0 %1081
    %v1083 = vadd.f32 %v968, %v969
    %1084 = vadd.xlane.f32.xlu0 %v1083
    %v1085 = vpop.xlane.xlu0 %1084
    %v1086 = vadd.f32 %v970, %v971
    %1087 = vadd.xlane.f32.xlu0 %v1086
    %v1088 = vpop.xlane.xlu0 %1087
    %v1089 = vadd.f32 %v972, %v973
    %1090 = vadd.xlane.f32.xlu0 %v1089
    %v1091 = vpop.xlane.xlu0 %1090
    %v1092 = vadd.f32 %v974, %v975
    %1093 = vadd.xlane.f32.xlu0 %v1092
    %v1094 = vpop.xlane.xlu0 %1093
    %v1095 = vadd.f32 %v976, %v977
    %1096 = vadd.xlane.f32.xlu0 %v1095
    %v1097 = vpop.xlane.xlu0 %1096
    %v1098 = vadd.f32 %v978, %v979
    %1099 = vadd.xlane.f32.xlu0 %v1098
    %v1100 = vpop.xlane.xlu0 %1099
    %v1101 = vadd.f32 %v980, %v981
    %1102 = vadd.xlane.f32.xlu0 %v1101
    %v1103 = vpop.xlane.xlu0 %1102
    %v1104 = vadd.f32 %v982, %v983
    %1105 = vadd.xlane.f32.xlu0 %v1104
    %v1106 = vpop.xlane.xlu0 %1105
    %v1107 = vadd.f32 %v984, %v985
    %1108 = vadd.xlane.f32.xlu0 %v1107
    %v1109 = vpop.xlane.xlu0 %1108
    %v1110 = vadd.f32 %v986, %v987
    %1111 = vadd.xlane.f32.xlu0 %v1110
    %v1112 = vpop.xlane.xlu0 %1111
    %v1113 = vadd.f32 %v988, %v989
    %1114 = vadd.xlane.f32.xlu0 %v1113
    %v1115 = vpop.xlane.xlu0 %1114
    %v1116 = vadd.f32 %v990, %v991
    %1117 = vadd.xlane.f32.xlu0 %v1116
    %v1118 = vpop.xlane.xlu0 %1117
    %v1119 = vadd.f32 %v992, %v993
    %1120 = vadd.xlane.f32.xlu0 %v1119
    %v1121 = vpop.xlane.xlu0 %1120
    %v1122 = vadd.f32 %v994, %v995
    %1123 = vadd.xlane.f32.xlu0 %v1122
    %v1124 = vpop.xlane.xlu0 %1123
    %v1125 = vadd.f32 %v996, %v997
    %1126 = vadd.xlane.f32.xlu0 %v1125
    %v1127 = vpop.xlane.xlu0 %1126
    %v1128 = vadd.f32 %v998, %v999
    %1129 = vadd.xlane.f32.xlu0 %v1128
    %v1130 = vpop.xlane.xlu0 %1129
    %v1131 = vadd.f32 %v1000, %v1001
    %1132 = vadd.xlane.f32.xlu0 %v1131
    %v1133 = vpop.xlane.xlu0 %1132
    %v1134 = vadd.f32 %v1002, %v1003
    %1135 = vadd.xlane.f32.xlu0 %v1134
    %v1136 = vpop.xlane.xlu0 %1135
    %v1137 = vadd.f32 %v1004, %v1005
    %1138 = vadd.xlane.f32.xlu0 %v1137
    %v1139 = vpop.xlane.xlu0 %1138
    %v1140 = vadd.f32 %v1006, %v1007
    %1141 = vadd.xlane.f32.xlu0 %v1140
    %v1142 = vpop.xlane.xlu0 %1141
    %v1143 = vadd.f32 %v1008, %v1009
    %1144 = vadd.xlane.f32.xlu0 %v1143
    %v1145 = vpop.xlane.xlu0 %1144
    %v1146 = vadd.f32 %v1010, %v1011
    %1147 = vadd.xlane.f32.xlu0 %v1146
    %v1148 = vpop.xlane.xlu0 %1147
    %v1149 = vadd.f32 %v1012, %v1013
    %1150 = vadd.xlane.f32.xlu0 %v1149
    %v1151 = vpop.xlane.xlu0 %1150
    %v1152 = vadd.f32 %v1014, %v1015
    %1153 = vadd.xlane.f32.xlu0 %v1152
    %v1154 = vpop.xlane.xlu0 %1153
    %v1155 = vadd.f32 %v1016, %v1017
    %1156 = vadd.xlane.f32.xlu0 %v1155
    %v1157 = vpop.xlane.xlu0 %1156
    %v1158 = vadd.f32 %v1018, %v1019
    %1159 = vadd.xlane.f32.xlu0 %v1158
    %v1160 = vpop.xlane.xlu0 %1159
    %v1161 = vadd.f32 %v1020, %v1021
    %1162 = vadd.xlane.f32.xlu0 %v1161
    %v1163 = vpop.xlane.xlu0 %1162
    %v1164 = vadd.f32 %v1022, %v1023
    %1165 = vadd.xlane.f32.xlu0 %v1164
    %v1166 = vpop.xlane.xlu0 %1165
    %v1167 = vadd.f32 %v1024, %v1025
    %1168 = vadd.xlane.f32.xlu0 %v1167
    %v1169 = vpop.xlane.xlu0 %1168
    %v1170 = vrcp.pop 256.0
    %v1171 = vmul.f32 %v1028, %v1170
    %v1172 = vmul.f32 %v1031, %v1170
    %v1173 = vmul.f32 %v1034, %v1170
    %v1174 = vmul.f32 %v1037, %v1170
    %v1175 = vmul.f32 %v1040, %v1170
    %v1176 = vmul.f32 %v1043, %v1170
    %v1177 = vmul.f32 %v1046, %v1170
    %v1178 = vmul.f32 %v1049, %v1170
    %v1179 = vmul.f32 %v1052, %v1170
    %v1180 = vmul.f32 %v1055, %v1170
    %v1181 = vmul.f32 %v1058, %v1170
    %v1182 = vmul.f32 %v1061, %v1170
    %v1183 = vmul.f32 %v1064, %v1170
    %v1184 = vmul.f32 %v1067, %v1170
    %v1185 = vmul.f32 %v1070, %v1170
    %v1186 = vmul.f32 %v1073, %v1170
    %v1187 = vmul.f32 %v1076, %v1170
    %v1188 = vmul.f32 %v1079, %v1170
    %v1189 = vmul.f32 %v1082, %v1170
    %v1190 = vmul.f32 %v1085, %v1170
    %v1191 = vmul.f32 %v1088, %v1170
    %v1192 = vmul.f32 %v1091, %v1170
    %v1193 = vmul.f32 %v1094, %v1170
    %v1194 = vmul.f32 %v1097, %v1170
    %v1195 = vmul.f32 %v1100, %v1170
    %v1196 = vmul.f32 %v1103, %v1170
    %v1197 = vmul.f32 %v1106, %v1170
    %v1198 = vmul.f32 %v1109, %v1170
    %v1199 = vmul.f32 %v1112, %v1170
    %v1200 = vmul.f32 %v1115, %v1170
    %v1201 = vmul.f32 %v1118, %v1170
    %v1202 = vmul.f32 %v1121, %v1170
    %v1203 = vmul.f32 %v1124, %v1170
    %v1204 = vmul.f32 %v1127, %v1170
    %v1205 = vmul.f32 %v1130, %v1170
    %v1206 = vmul.f32 %v1133, %v1170
    %v1207 = vmul.f32 %v1136, %v1170
    %v1208 = vmul.f32 %v1139, %v1170
    %v1209 = vmul.f32 %v1142, %v1170
    %v1210 = vmul.f32 %v1145, %v1170
    %v1211 = vmul.f32 %v1148, %v1170
    %v1212 = vmul.f32 %v1151, %v1170
    %v1213 = vmul.f32 %v1154, %v1170
    %v1214 = vmul.f32 %v1157, %v1170
    %v1215 = vmul.f32 %v1160, %v1170
    %v1216 = vmul.f32 %v1163, %v1170
    %v1217 = vmul.f32 %v1166, %v1170
    %v1218 = vmul.f32 %v1169, %v1170
    %v1219 = vmul.f32 %v930, %v930
    %v1220 = vmul.f32 %v931, %v931
    %v1221 = vmul.f32 %v932, %v932
    %v1222 = vmul.f32 %v933, %v933
    %v1223 = vmul.f32 %v934, %v934
    %v1224 = vmul.f32 %v935, %v935
    %v1225 = vmul.f32 %v936, %v936
    %v1226 = vmul.f32 %v937, %v937
    %v1227 = vmul.f32 %v938, %v938
    %v1228 = vmul.f32 %v939, %v939
    %v1229 = vmul.f32 %v940, %v940
    %v1230 = vmul.f32 %v941, %v941
    %v1231 = vmul.f32 %v942, %v942
    %v1232 = vmul.f32 %v943, %v943
    %v1233 = vmul.f32 %v944, %v944
    %v1234 = vmul.f32 %v945, %v945
    %v1235 = vmul.f32 %v946, %v946
    %v1236 = vmul.f32 %v947, %v947
    %v1237 = vmul.f32 %v948, %v948
    %v1238 = vmul.f32 %v949, %v949
    %v1239 = vmul.f32 %v950, %v950
    %v1240 = vmul.f32 %v951, %v951
    %v1241 = vmul.f32 %v952, %v952
    %v1242 = vmul.f32 %v953, %v953
    %v1243 = vmul.f32 %v954, %v954
    %v1244 = vmul.f32 %v955, %v955
    %v1245 = vmul.f32 %v956, %v956
    %v1246 = vmul.f32 %v957, %v957
    %v1247 = vmul.f32 %v958, %v958
    %v1248 = vmul.f32 %v959, %v959
    %v1249 = vmul.f32 %v960, %v960
    %v1250 = vmul.f32 %v961, %v961
    %v1251 = vmul.f32 %v962, %v962
    %v1252 = vmul.f32 %v963, %v963
    %v1253 = vmul.f32 %v964, %v964
    %v1254 = vmul.f32 %v965, %v965
    %v1255 = vmul.f32 %v966, %v966
    %v1256 = vmul.f32 %v967, %v967
    %v1257 = vmul.f32 %v968, %v968
    %v1258 = vmul.f32 %v969, %v969
    %v1259 = vmul.f32 %v970, %v970
    %v1260 = vmul.f32 %v971, %v971
    %v1261 = vmul.f32 %v972, %v972
    %v1262 = vmul.f32 %v973, %v973
    %v1263 = vmul.f32 %v974, %v974
    %v1264 = vmul.f32 %v975, %v975
    %v1265 = vmul.f32 %v976, %v976
    %v1266 = vmul.f32 %v977, %v977
    %v1267 = vmul.f32 %v978, %v978
    %v1268 = vmul.f32 %v979, %v979
    %v1269 = vmul.f32 %v980, %v980
    %v1270 = vmul.f32 %v981, %v981
    %v1271 = vmul.f32 %v982, %v982
    %v1272 = vmul.f32 %v983, %v983
    %v1273 = vmul.f32 %v984, %v984
    %v1274 = vmul.f32 %v985, %v985
    %v1275 = vmul.f32 %v986, %v986
    %v1276 = vmul.f32 %v987, %v987
    %v1277 = vmul.f32 %v988, %v988
    %v1278 = vmul.f32 %v989, %v989
    %v1279 = vmul.f32 %v990, %v990
    %v1280 = vmul.f32 %v991, %v991
    %v1281 = vmul.f32 %v992, %v992
    %v1282 = vmul.f32 %v993, %v993
    %v1283 = vmul.f32 %v994, %v994
    %v1284 = vmul.f32 %v995, %v995
    %v1285 = vmul.f32 %v996, %v996
    %v1286 = vmul.f32 %v997, %v997
    %v1287 = vmul.f32 %v998, %v998
    %v1288 = vmul.f32 %v999, %v999
    %v1289 = vmul.f32 %v1000, %v1000
    %v1290 = vmul.f32 %v1001, %v1001
    %v1291 = vmul.f32 %v1002, %v1002
    %v1292 = vmul.f32 %v1003, %v1003
    %v1293 = vmul.f32 %v1004, %v1004
    %v1294 = vmul.f32 %v1005, %v1005
    %v1295 = vmul.f32 %v1006, %v1006
    %v1296 = vmul.f32 %v1007, %v1007
    %v1297 = vmul.f32 %v1008, %v1008
    %v1298 = vmul.f32 %v1009, %v1009
    %v1299 = vmul.f32 %v1010, %v1010
    %v1300 = vmul.f32 %v1011, %v1011
    %v1301 = vmul.f32 %v1012, %v1012
    %v1302 = vmul.f32 %v1013, %v1013
    %v1303 = vmul.f32 %v1014, %v1014
    %v1304 = vmul.f32 %v1015, %v1015
    %v1305 = vmul.f32 %v1016, %v1016
    %v1306 = vmul.f32 %v1017, %v1017
    %v1307 = vmul.f32 %v1018, %v1018
    %v1308 = vmul.f32 %v1019, %v1019
    %v1309 = vmul.f32 %v1020, %v1020
    %v1310 = vmul.f32 %v1021, %v1021
    %v1311 = vmul.f32 %v1022, %v1022
    %v1312 = vmul.f32 %v1023, %v1023
    %v1313 = vmul.f32 %v1024, %v1024
    %v1314 = vmul.f32 %v1025, %v1025
    %v1315 = vadd.f32 %v1219, %v1220
    %1316 = vadd.xlane.f32.xlu0 %v1315
    %v1317 = vpop.xlane.xlu0 %1316
    %v1318 = vadd.f32 %v1221, %v1222
    %1319 = vadd.xlane.f32.xlu0 %v1318
    %v1320 = vpop.xlane.xlu0 %1319
    %v1321 = vadd.f32 %v1223, %v1224
    %1322 = vadd.xlane.f32.xlu0 %v1321
    %v1323 = vpop.xlane.xlu0 %1322
    %v1324 = vadd.f32 %v1225, %v1226
    %1325 = vadd.xlane.f32.xlu0 %v1324
    %v1326 = vpop.xlane.xlu0 %1325
    %v1327 = vadd.f32 %v1227, %v1228
    %1328 = vadd.xlane.f32.xlu0 %v1327
    %v1329 = vpop.xlane.xlu0 %1328
    %v1330 = vadd.f32 %v1229, %v1230
    %1331 = vadd.xlane.f32.xlu0 %v1330
    %v1332 = vpop.xlane.xlu0 %1331
    %v1333 = vadd.f32 %v1231, %v1232
    %1334 = vadd.xlane.f32.xlu0 %v1333
    %v1335 = vpop.xlane.xlu0 %1334
    %v1336 = vadd.f32 %v1233, %v1234
    %1337 = vadd.xlane.f32.xlu0 %v1336
    %v1338 = vpop.xlane.xlu0 %1337
    %v1339 = vadd.f32 %v1235, %v1236
    %1340 = vadd.xlane.f32.xlu0 %v1339
    %v1341 = vpop.xlane.xlu0 %1340
    %v1342 = vadd.f32 %v1237, %v1238
    %1343 = vadd.xlane.f32.xlu0 %v1342
    %v1344 = vpop.xlane.xlu0 %1343
    %v1345 = vadd.f32 %v1239, %v1240
    %1346 = vadd.xlane.f32.xlu0 %v1345
    %v1347 = vpop.xlane.xlu0 %1346
    %v1348 = vadd.f32 %v1241, %v1242
    %1349 = vadd.xlane.f32.xlu0 %v1348
    %v1350 = vpop.xlane.xlu0 %1349
    %v1351 = vadd.f32 %v1243, %v1244
    %1352 = vadd.xlane.f32.xlu0 %v1351
    %v1353 = vpop.xlane.xlu0 %1352
    %v1354 = vadd.f32 %v1245, %v1246
    %1355 = vadd.xlane.f32.xlu0 %v1354
    %v1356 = vpop.xlane.xlu0 %1355
    %v1357 = vadd.f32 %v1247, %v1248
    %1358 = vadd.xlane.f32.xlu0 %v1357
    %v1359 = vpop.xlane.xlu0 %1358
    %v1360 = vadd.f32 %v1249, %v1250
    %1361 = vadd.xlane.f32.xlu0 %v1360
    %v1362 = vpop.xlane.xlu0 %1361
    %v1363 = vadd.f32 %v1251, %v1252
    %1364 = vadd.xlane.f32.xlu0 %v1363
    %v1365 = vpop.xlane.xlu0 %1364
    %v1366 = vadd.f32 %v1253, %v1254
    %1367 = vadd.xlane.f32.xlu0 %v1366
    %v1368 = vpop.xlane.xlu0 %1367
    %v1369 = vadd.f32 %v1255, %v1256
    %1370 = vadd.xlane.f32.xlu0 %v1369
    %v1371 = vpop.xlane.xlu0 %1370
    %v1372 = vadd.f32 %v1257, %v1258
    %1373 = vadd.xlane.f32.xlu0 %v1372
    %v1374 = vpop.xlane.xlu0 %1373
    %v1375 = vadd.f32 %v1259, %v1260
    %1376 = vadd.xlane.f32.xlu0 %v1375
    %v1377 = vpop.xlane.xlu0 %1376
    %v1378 = vadd.f32 %v1261, %v1262
    %1379 = vadd.xlane.f32.xlu0 %v1378
    %v1380 = vpop.xlane.xlu0 %1379
    %v1381 = vadd.f32 %v1263, %v1264
    %1382 = vadd.xlane.f32.xlu0 %v1381
    %v1383 = vpop.xlane.xlu0 %1382
    %v1384 = vadd.f32 %v1265, %v1266
    %1385 = vadd.xlane.f32.xlu0 %v1384
    %v1386 = vpop.xlane.xlu0 %1385
    %v1387 = vadd.f32 %v1267, %v1268
    %1388 = vadd.xlane.f32.xlu0 %v1387
    %v1389 = vpop.xlane.xlu0 %1388
    %v1390 = vadd.f32 %v1269, %v1270
    %1391 = vadd.xlane.f32.xlu0 %v1390
    %v1392 = vpop.xlane.xlu0 %1391
    %v1393 = vadd.f32 %v1271, %v1272
    %1394 = vadd.xlane.f32.xlu0 %v1393
    %v1395 = vpop.xlane.xlu0 %1394
    %v1396 = vadd.f32 %v1273, %v1274
    %1397 = vadd.xlane.f32.xlu0 %v1396
    %v1398 = vpop.xlane.xlu0 %1397
    %v1399 = vadd.f32 %v1275, %v1276
    %1400 = vadd.xlane.f32.xlu0 %v1399
    %v1401 = vpop.xlane.xlu0 %1400
    %v1402 = vadd.f32 %v1277, %v1278
    %1403 = vadd.xlane.f32.xlu0 %v1402
    %v1404 = vpop.xlane.xlu0 %1403
    %v1405 = vadd.f32 %v1279, %v1280
    %1406 = vadd.xlane.f32.xlu0 %v1405
    %v1407 = vpop.xlane.xlu0 %1406
    %v1408 = vadd.f32 %v1281, %v1282
    %1409 = vadd.xlane.f32.xlu0 %v1408
    %v1410 = vpop.xlane.xlu0 %1409
    %v1411 = vadd.f32 %v1283, %v1284
    %1412 = vadd.xlane.f32.xlu0 %v1411
    %v1413 = vpop.xlane.xlu0 %1412
    %v1414 = vadd.f32 %v1285, %v1286
    %1415 = vadd.xlane.f32.xlu0 %v1414
    %v1416 = vpop.xlane.xlu0 %1415
    %v1417 = vadd.f32 %v1287, %v1288
    %1418 = vadd.xlane.f32.xlu0 %v1417
    %v1419 = vpop.xlane.xlu0 %1418
    %v1420 = vadd.f32 %v1289, %v1290
    %1421 = vadd.xlane.f32.xlu0 %v1420
    %v1422 = vpop.xlane.xlu0 %1421
    %v1423 = vadd.f32 %v1291, %v1292
    %1424 = vadd.xlane.f32.xlu0 %v1423
    %v1425 = vpop.xlane.xlu0 %1424
    %v1426 = vadd.f32 %v1293, %v1294
    %1427 = vadd.xlane.f32.xlu0 %v1426
    %v1428 = vpop.xlane.xlu0 %1427
    %v1429 = vadd.f32 %v1295, %v1296
    %1430 = vadd.xlane.f32.xlu0 %v1429
    %v1431 = vpop.xlane.xlu0 %1430
    %v1432 = vadd.f32 %v1297, %v1298
    %1433 = vadd.xlane.f32.xlu0 %v1432
    %v1434 = vpop.xlane.xlu0 %1433
    %v1435 = vadd.f32 %v1299, %v1300
    %1436 = vadd.xlane.f32.xlu0 %v1435
    %v1437 = vpop.xlane.xlu0 %1436
    %v1438 = vadd.f32 %v1301, %v1302
    %1439 = vadd.xlane.f32.xlu0 %v1438
    %v1440 = vpop.xlane.xlu0 %1439
    %v1441 = vadd.f32 %v1303, %v1304
    %1442 = vadd.xlane.f32.xlu0 %v1441
    %v1443 = vpop.xlane.xlu0 %1442
    %v1444 = vadd.f32 %v1305, %v1306
    %1445 = vadd.xlane.f32.xlu0 %v1444
    %v1446 = vpop.xlane.xlu0 %1445
    %v1447 = vadd.f32 %v1307, %v1308
    %1448 = vadd.xlane.f32.xlu0 %v1447
    %v1449 = vpop.xlane.xlu0 %1448
    %v1450 = vadd.f32 %v1309, %v1310
    %1451 = vadd.xlane.f32.xlu0 %v1450
    %v1452 = vpop.xlane.xlu0 %1451
    %v1453 = vadd.f32 %v1311, %v1312
    %1454 = vadd.xlane.f32.xlu0 %v1453
    %v1455 = vpop.xlane.xlu0 %1454
    %v1456 = vadd.f32 %v1313, %v1314
    %1457 = vadd.xlane.f32.xlu0 %v1456
    %v1458 = vpop.xlane.xlu0 %1457
    %v1459 = vmul.f32 %v1317, %v1170
    %v1460 = vmul.f32 %v1320, %v1170
    %v1461 = vmul.f32 %v1323, %v1170
    %v1462 = vmul.f32 %v1326, %v1170
    %v1463 = vmul.f32 %v1329, %v1170
    %v1464 = vmul.f32 %v1332, %v1170
    %v1465 = vmul.f32 %v1335, %v1170
    %v1466 = vmul.f32 %v1338, %v1170
    %v1467 = vmul.f32 %v1341, %v1170
    %v1468 = vmul.f32 %v1344, %v1170
    %v1469 = vmul.f32 %v1347, %v1170
    %v1470 = vmul.f32 %v1350, %v1170
    %v1471 = vmul.f32 %v1353, %v1170
    %v1472 = vmul.f32 %v1356, %v1170
    %v1473 = vmul.f32 %v1359, %v1170
    %v1474 = vmul.f32 %v1362, %v1170
    %v1475 = vmul.f32 %v1365, %v1170
    %v1476 = vmul.f32 %v1368, %v1170
    %v1477 = vmul.f32 %v1371, %v1170
    %v1478 = vmul.f32 %v1374, %v1170
    %v1479 = vmul.f32 %v1377, %v1170
    %v1480 = vmul.f32 %v1380, %v1170
    %v1481 = vmul.f32 %v1383, %v1170
    %v1482 = vmul.f32 %v1386, %v1170
    %v1483 = vmul.f32 %v1389, %v1170
    %v1484 = vmul.f32 %v1392, %v1170
    %v1485 = vmul.f32 %v1395, %v1170
    %v1486 = vmul.f32 %v1398, %v1170
    %v1487 = vmul.f32 %v1401, %v1170
    %v1488 = vmul.f32 %v1404, %v1170
    %v1489 = vmul.f32 %v1407, %v1170
    %v1490 = vmul.f32 %v1410, %v1170
    %v1491 = vmul.f32 %v1413, %v1170
    %v1492 = vmul.f32 %v1416, %v1170
    %v1493 = vmul.f32 %v1419, %v1170
    %v1494 = vmul.f32 %v1422, %v1170
    %v1495 = vmul.f32 %v1425, %v1170
    %v1496 = vmul.f32 %v1428, %v1170
    %v1497 = vmul.f32 %v1431, %v1170
    %v1498 = vmul.f32 %v1434, %v1170
    %v1499 = vmul.f32 %v1437, %v1170
    %v1500 = vmul.f32 %v1440, %v1170
    %v1501 = vmul.f32 %v1443, %v1170
    %v1502 = vmul.f32 %v1446, %v1170
    %v1503 = vmul.f32 %v1449, %v1170
    %v1504 = vmul.f32 %v1452, %v1170
    %v1505 = vmul.f32 %v1455, %v1170
    %v1506 = vmul.f32 %v1458, %v1170
    %v1507 = vmul.f32 %v1171, %v1171
    %v1508 = vmul.f32 %v1172, %v1172
    %v1509 = vmul.f32 %v1173, %v1173
    %v1510 = vmul.f32 %v1174, %v1174
    %v1511 = vmul.f32 %v1175, %v1175
    %v1512 = vmul.f32 %v1176, %v1176
    %v1513 = vmul.f32 %v1177, %v1177
    %v1514 = vmul.f32 %v1178, %v1178
    %v1515 = vmul.f32 %v1179, %v1179
    %v1516 = vmul.f32 %v1180, %v1180
    %v1517 = vmul.f32 %v1181, %v1181
    %v1518 = vmul.f32 %v1182, %v1182
    %v1519 = vmul.f32 %v1183, %v1183
    %v1520 = vmul.f32 %v1184, %v1184
    %v1521 = vmul.f32 %v1185, %v1185
    %v1522 = vmul.f32 %v1186, %v1186
    %v1523 = vmul.f32 %v1187, %v1187
    %v1524 = vmul.f32 %v1188, %v1188
    %v1525 = vmul.f32 %v1189, %v1189
    %v1526 = vmul.f32 %v1190, %v1190
    %v1527 = vmul.f32 %v1191, %v1191
    %v1528 = vmul.f32 %v1192, %v1192
    %v1529 = vmul.f32 %v1193, %v1193
    %v1530 = vmul.f32 %v1194, %v1194
    %v1531 = vmul.f32 %v1195, %v1195
    %v1532 = vmul.f32 %v1196, %v1196
    %v1533 = vmul.f32 %v1197, %v1197
    %v1534 = vmul.f32 %v1198, %v1198
    %v1535 = vmul.f32 %v1199, %v1199
    %v1536 = vmul.f32 %v1200, %v1200
    %v1537 = vmul.f32 %v1201, %v1201
    %v1538 = vmul.f32 %v1202, %v1202
    %v1539 = vmul.f32 %v1203, %v1203
    %v1540 = vmul.f32 %v1204, %v1204
    %v1541 = vmul.f32 %v1205, %v1205
    %v1542 = vmul.f32 %v1206, %v1206
    %v1543 = vmul.f32 %v1207, %v1207
    %v1544 = vmul.f32 %v1208, %v1208
    %v1545 = vmul.f32 %v1209, %v1209
    %v1546 = vmul.f32 %v1210, %v1210
    %v1547 = vmul.f32 %v1211, %v1211
    %v1548 = vmul.f32 %v1212, %v1212
    %v1549 = vmul.f32 %v1213, %v1213
    %v1550 = vmul.f32 %v1214, %v1214
    %v1551 = vmul.f32 %v1215, %v1215
    %v1552 = vmul.f32 %v1216, %v1216
    %v1553 = vmul.f32 %v1217, %v1217
    %v1554 = vmul.f32 %v1218, %v1218
    %v1555 = vsub.f32 %v1459, %v1507
    %v1556 = vsub.f32 %v1460, %v1508
    %v1557 = vsub.f32 %v1461, %v1509
    %v1558 = vsub.f32 %v1462, %v1510
    %v1559 = vsub.f32 %v1463, %v1511
    %v1560 = vsub.f32 %v1464, %v1512
    %v1561 = vsub.f32 %v1465, %v1513
    %v1562 = vsub.f32 %v1466, %v1514
    %v1563 = vsub.f32 %v1467, %v1515
    %v1564 = vsub.f32 %v1468, %v1516
    %v1565 = vsub.f32 %v1469, %v1517
    %v1566 = vsub.f32 %v1470, %v1518
    %v1567 = vsub.f32 %v1471, %v1519
    %v1568 = vsub.f32 %v1472, %v1520
    %v1569 = vsub.f32 %v1473, %v1521
    %v1570 = vsub.f32 %v1474, %v1522
    %v1571 = vsub.f32 %v1475, %v1523
    %v1572 = vsub.f32 %v1476, %v1524
    %v1573 = vsub.f32 %v1477, %v1525
    %v1574 = vsub.f32 %v1478, %v1526
    %v1575 = vsub.f32 %v1479, %v1527
    %v1576 = vsub.f32 %v1480, %v1528
    %v1577 = vsub.f32 %v1481, %v1529
    %v1578 = vsub.f32 %v1482, %v1530
    %v1579 = vsub.f32 %v1483, %v1531
    %v1580 = vsub.f32 %v1484, %v1532
    %v1581 = vsub.f32 %v1485, %v1533
    %v1582 = vsub.f32 %v1486, %v1534
    %v1583 = vsub.f32 %v1487, %v1535
    %v1584 = vsub.f32 %v1488, %v1536
    %v1585 = vsub.f32 %v1489, %v1537
    %v1586 = vsub.f32 %v1490, %v1538
    %v1587 = vsub.f32 %v1491, %v1539
    %v1588 = vsub.f32 %v1492, %v1540
    %v1589 = vsub.f32 %v1493, %v1541
    %v1590 = vsub.f32 %v1494, %v1542
    %v1591 = vsub.f32 %v1495, %v1543
    %v1592 = vsub.f32 %v1496, %v1544
    %v1593 = vsub.f32 %v1497, %v1545
    %v1594 = vsub.f32 %v1498, %v1546
    %v1595 = vsub.f32 %v1499, %v1547
    %v1596 = vsub.f32 %v1500, %v1548
    %v1597 = vsub.f32 %v1501, %v1549
    %v1598 = vsub.f32 %v1502, %v1550
    %v1599 = vsub.f32 %v1503, %v1551
    %v1600 = vsub.f32 %v1504, %v1552
    %v1601 = vsub.f32 %v1505, %v1553
    %v1602 = vsub.f32 %v1506, %v1554
    %v1603 = vmax.f32 %v1555, 0.0
    %v1604 = vmax.f32 %v1556, 0.0
    %v1605 = vmax.f32 %v1557, 0.0
    %v1606 = vmax.f32 %v1558, 0.0
    %v1607 = vmax.f32 %v1559, 0.0
    %v1608 = vmax.f32 %v1560, 0.0
    %v1609 = vmax.f32 %v1561, 0.0
    %v1610 = vmax.f32 %v1562, 0.0
    %v1611 = vmax.f32 %v1563, 0.0
    %v1612 = vmax.f32 %v1564, 0.0
    %v1613 = vmax.f32 %v1565, 0.0
    %v1614 = vmax.f32 %v1566, 0.0
    %v1615 = vmax.f32 %v1567, 0.0
    %v1616 = vmax.f32 %v1568, 0.0
    %v1617 = vmax.f32 %v1569, 0.0
    %v1618 = vmax.f32 %v1570, 0.0
    %v1619 = vmax.f32 %v1571, 0.0
    %v1620 = vmax.f32 %v1572, 0.0
    %v1621 = vmax.f32 %v1573, 0.0
    %v1622 = vmax.f32 %v1574, 0.0
    %v1623 = vmax.f32 %v1575, 0.0
    %v1624 = vmax.f32 %v1576, 0.0
    %v1625 = vmax.f32 %v1577, 0.0
    %v1626 = vmax.f32 %v1578, 0.0
    %v1627 = vmax.f32 %v1579, 0.0
    %v1628 = vmax.f32 %v1580, 0.0
    %v1629 = vmax.f32 %v1581, 0.0
    %v1630 = vmax.f32 %v1582, 0.0
    %v1631 = vmax.f32 %v1583, 0.0
    %v1632 = vmax.f32 %v1584, 0.0
    %v1633 = vmax.f32 %v1585, 0.0
    %v1634 = vmax.f32 %v1586, 0.0
    %v1635 = vmax.f32 %v1587, 0.0
    %v1636 = vmax.f32 %v1588, 0.0
    %v1637 = vmax.f32 %v1589, 0.0
    %v1638 = vmax.f32 %v1590, 0.0
    %v1639 = vmax.f32 %v1591, 0.0
    %v1640 = vmax.f32 %v1592, 0.0
    %v1641 = vmax.f32 %v1593, 0.0
    %v1642 = vmax.f32 %v1594, 0.0
    %v1643 = vmax.f32 %v1595, 0.0
    %v1644 = vmax.f32 %v1596, 0.0
    %v1645 = vmax.f32 %v1597, 0.0
    %v1646 = vmax.f32 %v1598, 0.0
    %v1647 = vmax.f32 %v1599, 0.0
    %v1648 = vmax.f32 %v1600, 0.0
    %v1649 = vmax.f32 %v1601, 0.0
    %v1650 = vmax.f32 %v1602, 0.0
    %v1651 = vadd.f32 %v1603, 1e-12
    %v1652 = vadd.f32 %v1604, 1e-12
    %v1653 = vadd.f32 %v1605, 1e-12
    %v1654 = vadd.f32 %v1606, 1e-12
    %v1655 = vadd.f32 %v1607, 1e-12
    %v1656 = vadd.f32 %v1608, 1e-12
    %v1657 = vadd.f32 %v1609, 1e-12
    %v1658 = vadd.f32 %v1610, 1e-12
    %v1659 = vadd.f32 %v1611, 1e-12
    %v1660 = vadd.f32 %v1612, 1e-12
    %v1661 = vadd.f32 %v1613, 1e-12
    %v1662 = vadd.f32 %v1614, 1e-12
    %v1663 = vadd.f32 %v1615, 1e-12
    %v1664 = vadd.f32 %v1616, 1e-12
    %v1665 = vadd.f32 %v1617, 1e-12
    %v1666 = vadd.f32 %v1618, 1e-12
    %v1667 = vadd.f32 %v1619, 1e-12
    %v1668 = vadd.f32 %v1620, 1e-12
    %v1669 = vadd.f32 %v1621, 1e-12
    %v1670 = vadd.f32 %v1622, 1e-12
    %v1671 = vadd.f32 %v1623, 1e-12
    %v1672 = vadd.f32 %v1624, 1e-12
    %v1673 = vadd.f32 %v1625, 1e-12
    %v1674 = vadd.f32 %v1626, 1e-12
    %v1675 = vadd.f32 %v1627, 1e-12
    %v1676 = vadd.f32 %v1628, 1e-12
    %v1677 = vadd.f32 %v1629, 1e-12
    %v1678 = vadd.f32 %v1630, 1e-12
    %v1679 = vadd.f32 %v1631, 1e-12
    %v1680 = vadd.f32 %v1632, 1e-12
    %v1681 = vadd.f32 %v1633, 1e-12
    %v1682 = vadd.f32 %v1634, 1e-12
    %v1683 = vadd.f32 %v1635, 1e-12
    %v1684 = vadd.f32 %v1636, 1e-12
    %v1685 = vadd.f32 %v1637, 1e-12
    %v1686 = vadd.f32 %v1638, 1e-12
    %v1687 = vadd.f32 %v1639, 1e-12
    %v1688 = vadd.f32 %v1640, 1e-12
    %v1689 = vadd.f32 %v1641, 1e-12
    %v1690 = vadd.f32 %v1642, 1e-12
    %v1691 = vadd.f32 %v1643, 1e-12
    %v1692 = vadd.f32 %v1644, 1e-12
    %v1693 = vadd.f32 %v1645, 1e-12
    %v1694 = vadd.f32 %v1646, 1e-12
    %v1695 = vadd.f32 %v1647, 1e-12
    %v1696 = vadd.f32 %v1648, 1e-12
    %v1697 = vadd.f32 %v1649, 1e-12
    %v1698 = vadd.f32 %v1650, 1e-12
    %v1699 = vrsqrt.pop %v1651
    %v1700 = vrsqrt.pop %v1652
    %v1701 = vrsqrt.pop %v1653
    %v1702 = vrsqrt.pop %v1654
    %v1703 = vrsqrt.pop %v1655
    %v1704 = vrsqrt.pop %v1656
    %v1705 = vrsqrt.pop %v1657
    %v1706 = vrsqrt.pop %v1658
    %v1707 = vrsqrt.pop %v1659
    %v1708 = vrsqrt.pop %v1660
    %v1709 = vrsqrt.pop %v1661
    %v1710 = vrsqrt.pop %v1662
    %v1711 = vrsqrt.pop %v1663
    %v1712 = vrsqrt.pop %v1664
    %v1713 = vrsqrt.pop %v1665
    %v1714 = vrsqrt.pop %v1666
    %v1715 = vrsqrt.pop %v1667
    %v1716 = vrsqrt.pop %v1668
    %v1717 = vrsqrt.pop %v1669
    %v1718 = vrsqrt.pop %v1670
    %v1719 = vrsqrt.pop %v1671
    %v1720 = vrsqrt.pop %v1672
    %v1721 = vrsqrt.pop %v1673
    %v1722 = vrsqrt.pop %v1674
    %v1723 = vrsqrt.pop %v1675
    %v1724 = vrsqrt.pop %v1676
    %v1725 = vrsqrt.pop %v1677
    %v1726 = vrsqrt.pop %v1678
    %v1727 = vrsqrt.pop %v1679
    %v1728 = vrsqrt.pop %v1680
    %v1729 = vrsqrt.pop %v1681
    %v1730 = vrsqrt.pop %v1682
    %v1731 = vrsqrt.pop %v1683
    %v1732 = vrsqrt.pop %v1684
    %v1733 = vrsqrt.pop %v1685
    %v1734 = vrsqrt.pop %v1686
    %v1735 = vrsqrt.pop %v1687
    %v1736 = vrsqrt.pop %v1688
    %v1737 = vrsqrt.pop %v1689
    %v1738 = vrsqrt.pop %v1690
    %v1739 = vrsqrt.pop %v1691
    %v1740 = vrsqrt.pop %v1692
    %v1741 = vrsqrt.pop %v1693
    %v1742 = vrsqrt.pop %v1694
    %v1743 = vrsqrt.pop %v1695
    %v1744 = vrsqrt.pop %v1696
    %v1745 = vrsqrt.pop %v1697
    %v1746 = vrsqrt.pop %v1698
    %v1747 = vsub.f32 %v930, %v1171
    %v1748 = vsub.f32 %v931, %v1171
    %v1749 = vsub.f32 %v932, %v1172
    %v1750 = vsub.f32 %v933, %v1172
    %v1751 = vsub.f32 %v934, %v1173
    %v1752 = vsub.f32 %v935, %v1173
    %v1753 = vsub.f32 %v936, %v1174
    %v1754 = vsub.f32 %v937, %v1174
    %v1755 = vsub.f32 %v938, %v1175
    %v1756 = vsub.f32 %v939, %v1175
    %v1757 = vsub.f32 %v940, %v1176
    %v1758 = vsub.f32 %v941, %v1176
    %v1759 = vsub.f32 %v942, %v1177
    %v1760 = vsub.f32 %v943, %v1177
    %v1761 = vsub.f32 %v944, %v1178
    %v1762 = vsub.f32 %v945, %v1178
    %v1763 = vsub.f32 %v946, %v1179
    %v1764 = vsub.f32 %v947, %v1179
    %v1765 = vsub.f32 %v948, %v1180
    %v1766 = vsub.f32 %v949, %v1180
    %v1767 = vsub.f32 %v950, %v1181
    %v1768 = vsub.f32 %v951, %v1181
    %v1769 = vsub.f32 %v952, %v1182
    %v1770 = vsub.f32 %v953, %v1182
    %v1771 = vsub.f32 %v954, %v1183
    %v1772 = vsub.f32 %v955, %v1183
    %v1773 = vsub.f32 %v956, %v1184
    %v1774 = vsub.f32 %v957, %v1184
    %v1775 = vsub.f32 %v958, %v1185
    %v1776 = vsub.f32 %v959, %v1185
    %v1777 = vsub.f32 %v960, %v1186
    %v1778 = vsub.f32 %v961, %v1186
    %v1779 = vsub.f32 %v962, %v1187
    %v1780 = vsub.f32 %v963, %v1187
    %v1781 = vsub.f32 %v964, %v1188
    %v1782 = vsub.f32 %v965, %v1188
    %v1783 = vsub.f32 %v966, %v1189
    %v1784 = vsub.f32 %v967, %v1189
    %v1785 = vsub.f32 %v968, %v1190
    %v1786 = vsub.f32 %v969, %v1190
    %v1787 = vsub.f32 %v970, %v1191
    %v1788 = vsub.f32 %v971, %v1191
    %v1789 = vsub.f32 %v972, %v1192
    %v1790 = vsub.f32 %v973, %v1192
    %v1791 = vsub.f32 %v974, %v1193
    %v1792 = vsub.f32 %v975, %v1193
    %v1793 = vsub.f32 %v976, %v1194
    %v1794 = vsub.f32 %v977, %v1194
    %v1795 = vsub.f32 %v978, %v1195
    %v1796 = vsub.f32 %v979, %v1195
    %v1797 = vsub.f32 %v980, %v1196
    %v1798 = vsub.f32 %v981, %v1196
    %v1799 = vsub.f32 %v982, %v1197
    %v1800 = vsub.f32 %v983, %v1197
    %v1801 = vsub.f32 %v984, %v1198
    %v1802 = vsub.f32 %v985, %v1198
    %v1803 = vsub.f32 %v986, %v1199
    %v1804 = vsub.f32 %v987, %v1199
    %v1805 = vsub.f32 %v988, %v1200
    %v1806 = vsub.f32 %v989, %v1200
    %v1807 = vsub.f32 %v990, %v1201
    %v1808 = vsub.f32 %v991, %v1201
    %v1809 = vsub.f32 %v992, %v1202
    %v1810 = vsub.f32 %v993, %v1202
    %v1811 = vsub.f32 %v994, %v1203
    %v1812 = vsub.f32 %v995, %v1203
    %v1813 = vsub.f32 %v996, %v1204
    %v1814 = vsub.f32 %v997, %v1204
    %v1815 = vsub.f32 %v998, %v1205
    %v1816 = vsub.f32 %v999, %v1205
    %v1817 = vsub.f32 %v1000, %v1206
    %v1818 = vsub.f32 %v1001, %v1206
    %v1819 = vsub.f32 %v1002, %v1207
    %v1820 = vsub.f32 %v1003, %v1207
    %v1821 = vsub.f32 %v1004, %v1208
    %v1822 = vsub.f32 %v1005, %v1208
    %v1823 = vsub.f32 %v1006, %v1209
    %v1824 = vsub.f32 %v1007, %v1209
    %v1825 = vsub.f32 %v1008, %v1210
    %v1826 = vsub.f32 %v1009, %v1210
    %v1827 = vsub.f32 %v1010, %v1211
    %v1828 = vsub.f32 %v1011, %v1211
    %v1829 = vsub.f32 %v1012, %v1212
    %v1830 = vsub.f32 %v1013, %v1212
    %v1831 = vsub.f32 %v1014, %v1213
    %v1832 = vsub.f32 %v1015, %v1213
    %v1833 = vsub.f32 %v1016, %v1214
    %v1834 = vsub.f32 %v1017, %v1214
    %v1835 = vsub.f32 %v1018, %v1215
    %v1836 = vsub.f32 %v1019, %v1215
    %v1837 = vsub.f32 %v1020, %v1216
    %v1838 = vsub.f32 %v1021, %v1216
    %v1839 = vsub.f32 %v1022, %v1217
    %v1840 = vsub.f32 %v1023, %v1217
    %v1841 = vsub.f32 %v1024, %v1218
    %v1842 = vsub.f32 %v1025, %v1218
    %v1843 = vmul.f32 %v1747, %v1699
    %v1844 = vmul.f32 %v1748, %v1699
    %v1845 = vmul.f32 %v1749, %v1700
    %v1846 = vmul.f32 %v1750, %v1700
    %v1847 = vmul.f32 %v1751, %v1701
    %v1848 = vmul.f32 %v1752, %v1701
    %v1849 = vmul.f32 %v1753, %v1702
    %v1850 = vmul.f32 %v1754, %v1702
    %v1851 = vmul.f32 %v1755, %v1703
    %v1852 = vmul.f32 %v1756, %v1703
    %v1853 = vmul.f32 %v1757, %v1704
    %v1854 = vmul.f32 %v1758, %v1704
    %v1855 = vmul.f32 %v1759, %v1705
    %v1856 = vmul.f32 %v1760, %v1705
    %v1857 = vmul.f32 %v1761, %v1706
    %v1858 = vmul.f32 %v1762, %v1706
    %v1859 = vmul.f32 %v1763, %v1707
    %v1860 = vmul.f32 %v1764, %v1707
    %v1861 = vmul.f32 %v1765, %v1708
    %v1862 = vmul.f32 %v1766, %v1708
    %v1863 = vmul.f32 %v1767, %v1709
    %v1864 = vmul.f32 %v1768, %v1709
    %v1865 = vmul.f32 %v1769, %v1710
    %v1866 = vmul.f32 %v1770, %v1710
    %v1867 = vmul.f32 %v1771, %v1711
    %v1868 = vmul.f32 %v1772, %v1711
    %v1869 = vmul.f32 %v1773, %v1712
    %v1870 = vmul.f32 %v1774, %v1712
    %v1871 = vmul.f32 %v1775, %v1713
    %v1872 = vmul.f32 %v1776, %v1713
    %v1873 = vmul.f32 %v1777, %v1714
    %v1874 = vmul.f32 %v1778, %v1714
    %v1875 = vmul.f32 %v1779, %v1715
    %v1876 = vmul.f32 %v1780, %v1715
    %v1877 = vmul.f32 %v1781, %v1716
    %v1878 = vmul.f32 %v1782, %v1716
    %v1879 = vmul.f32 %v1783, %v1717
    %v1880 = vmul.f32 %v1784, %v1717
    %v1881 = vmul.f32 %v1785, %v1718
    %v1882 = vmul.f32 %v1786, %v1718
    %v1883 = vmul.f32 %v1787, %v1719
    %v1884 = vmul.f32 %v1788, %v1719
    %v1885 = vmul.f32 %v1789, %v1720
    %v1886 = vmul.f32 %v1790, %v1720
    %v1887 = vmul.f32 %v1791, %v1721
    %v1888 = vmul.f32 %v1792, %v1721
    %v1889 = vmul.f32 %v1793, %v1722
    %v1890 = vmul.f32 %v1794, %v1722
    %v1891 = vmul.f32 %v1795, %v1723
    %v1892 = vmul.f32 %v1796, %v1723
    %v1893 = vmul.f32 %v1797, %v1724
    %v1894 = vmul.f32 %v1798, %v1724
    %v1895 = vmul.f32 %v1799, %v1725
    %v1896 = vmul.f32 %v1800, %v1725
    %v1897 = vmul.f32 %v1801, %v1726
    %v1898 = vmul.f32 %v1802, %v1726
    %v1899 = vmul.f32 %v1803, %v1727
    %v1900 = vmul.f32 %v1804, %v1727
    %v1901 = vmul.f32 %v1805, %v1728
    %v1902 = vmul.f32 %v1806, %v1728
    %v1903 = vmul.f32 %v1807, %v1729
    %v1904 = vmul.f32 %v1808, %v1729
    %v1905 = vmul.f32 %v1809, %v1730
    %v1906 = vmul.f32 %v1810, %v1730
    %v1907 = vmul.f32 %v1811, %v1731
    %v1908 = vmul.f32 %v1812, %v1731
    %v1909 = vmul.f32 %v1813, %v1732
    %v1910 = vmul.f32 %v1814, %v1732
    %v1911 = vmul.f32 %v1815, %v1733
    %v1912 = vmul.f32 %v1816, %v1733
    %v1913 = vmul.f32 %v1817, %v1734
    %v1914 = vmul.f32 %v1818, %v1734
    %v1915 = vmul.f32 %v1819, %v1735
    %v1916 = vmul.f32 %v1820, %v1735
    %v1917 = vmul.f32 %v1821, %v1736
    %v1918 = vmul.f32 %v1822, %v1736
    %v1919 = vmul.f32 %v1823, %v1737
    %v1920 = vmul.f32 %v1824, %v1737
    %v1921 = vmul.f32 %v1825, %v1738
    %v1922 = vmul.f32 %v1826, %v1738
    %v1923 = vmul.f32 %v1827, %v1739
    %v1924 = vmul.f32 %v1828, %v1739
    %v1925 = vmul.f32 %v1829, %v1740
    %v1926 = vmul.f32 %v1830, %v1740
    %v1927 = vmul.f32 %v1831, %v1741
    %v1928 = vmul.f32 %v1832, %v1741
    %v1929 = vmul.f32 %v1833, %v1742
    %v1930 = vmul.f32 %v1834, %v1742
    %v1931 = vmul.f32 %v1835, %v1743
    %v1932 = vmul.f32 %v1836, %v1743
    %v1933 = vmul.f32 %v1837, %v1744
    %v1934 = vmul.f32 %v1838, %v1744
    %v1935 = vmul.f32 %v1839, %v1745
    %v1936 = vmul.f32 %v1840, %v1745
    %v1937 = vmul.f32 %v1841, %v1746
    %v1938 = vmul.f32 %v1842, %v1746
    %v1939 = vlaneseq
    %v1940 = vshrl.u32 %v1939, 7
    %v1941 = vsub.s32 1, %v1940
    %v1942 = vrot.slane %v151, %v1941
    %v1943 = vlaneseq
    %v1944 = vshrl.u32 %v1943, 7
    %v1945 = vsub.s32 1, %v1944
    %v1946 = vrot.slane %v152, %v1945
    %v1947 = vmul.f32 %v1843, %v1942
    %v1948 = vmul.f32 %v1844, %v1946
    %v1949 = vmul.f32 %v1845, %v1942
    %v1950 = vmul.f32 %v1846, %v1946
    %v1951 = vmul.f32 %v1847, %v1942
    %v1952 = vmul.f32 %v1848, %v1946
    %v1953 = vmul.f32 %v1849, %v1942
    %v1954 = vmul.f32 %v1850, %v1946
    %v1955 = vmul.f32 %v1851, %v1942
    %v1956 = vmul.f32 %v1852, %v1946
    %v1957 = vmul.f32 %v1853, %v1942
    %v1958 = vmul.f32 %v1854, %v1946
    %v1959 = vmul.f32 %v1855, %v1942
    %v1960 = vmul.f32 %v1856, %v1946
    %v1961 = vmul.f32 %v1857, %v1942
    %v1962 = vmul.f32 %v1858, %v1946
    %v1963 = vmul.f32 %v1859, %v1942
    %v1964 = vmul.f32 %v1860, %v1946
    %v1965 = vmul.f32 %v1861, %v1942
    %v1966 = vmul.f32 %v1862, %v1946
    %v1967 = vmul.f32 %v1863, %v1942
    %v1968 = vmul.f32 %v1864, %v1946
    %v1969 = vmul.f32 %v1865, %v1942
    %v1970 = vmul.f32 %v1866, %v1946
    %v1971 = vmul.f32 %v1867, %v1942
    %v1972 = vmul.f32 %v1868, %v1946
    %v1973 = vmul.f32 %v1869, %v1942
    %v1974 = vmul.f32 %v1870, %v1946
    %v1975 = vmul.f32 %v1871, %v1942
    %v1976 = vmul.f32 %v1872, %v1946
    %v1977 = vmul.f32 %v1873, %v1942
    %v1978 = vmul.f32 %v1874, %v1946
    %v1979 = vmul.f32 %v1875, %v1942
    %v1980 = vmul.f32 %v1876, %v1946
    %v1981 = vmul.f32 %v1877, %v1942
    %v1982 = vmul.f32 %v1878, %v1946
    %v1983 = vmul.f32 %v1879, %v1942
    %v1984 = vmul.f32 %v1880, %v1946
    %v1985 = vmul.f32 %v1881, %v1942
    %v1986 = vmul.f32 %v1882, %v1946
    %v1987 = vmul.f32 %v1883, %v1942
    %v1988 = vmul.f32 %v1884, %v1946
    %v1989 = vmul.f32 %v1885, %v1942
    %v1990 = vmul.f32 %v1886, %v1946
    %v1991 = vmul.f32 %v1887, %v1942
    %v1992 = vmul.f32 %v1888, %v1946
    %v1993 = vmul.f32 %v1889, %v1942
    %v1994 = vmul.f32 %v1890, %v1946
    %v1995 = vmul.f32 %v1891, %v1942
    %v1996 = vmul.f32 %v1892, %v1946
    %v1997 = vmul.f32 %v1893, %v1942
    %v1998 = vmul.f32 %v1894, %v1946
    %v1999 = vmul.f32 %v1895, %v1942
    %v2000 = vmul.f32 %v1896, %v1946
    %v2001 = vmul.f32 %v1897, %v1942
    %v2002 = vmul.f32 %v1898, %v1946
    %v2003 = vmul.f32 %v1899, %v1942
    %v2004 = vmul.f32 %v1900, %v1946
    %v2005 = vmul.f32 %v1901, %v1942
    %v2006 = vmul.f32 %v1902, %v1946
    %v2007 = vmul.f32 %v1903, %v1942
    %v2008 = vmul.f32 %v1904, %v1946
    %v2009 = vmul.f32 %v1905, %v1942
    %v2010 = vmul.f32 %v1906, %v1946
    %v2011 = vmul.f32 %v1907, %v1942
    %v2012 = vmul.f32 %v1908, %v1946
    %v2013 = vmul.f32 %v1909, %v1942
    %v2014 = vmul.f32 %v1910, %v1946
    %v2015 = vmul.f32 %v1911, %v1942
    %v2016 = vmul.f32 %v1912, %v1946
    %v2017 = vmul.f32 %v1913, %v1942
    %v2018 = vmul.f32 %v1914, %v1946
    %v2019 = vmul.f32 %v1915, %v1942
    %v2020 = vmul.f32 %v1916, %v1946
    %v2021 = vmul.f32 %v1917, %v1942
    %v2022 = vmul.f32 %v1918, %v1946
    %v2023 = vmul.f32 %v1919, %v1942
    %v2024 = vmul.f32 %v1920, %v1946
    %v2025 = vmul.f32 %v1921, %v1942
    %v2026 = vmul.f32 %v1922, %v1946
    %v2027 = vmul.f32 %v1923, %v1942
    %v2028 = vmul.f32 %v1924, %v1946
    %v2029 = vmul.f32 %v1925, %v1942
    %v2030 = vmul.f32 %v1926, %v1946
    %v2031 = vmul.f32 %v1927, %v1942
    %v2032 = vmul.f32 %v1928, %v1946
    %v2033 = vmul.f32 %v1929, %v1942
    %v2034 = vmul.f32 %v1930, %v1946
    %v2035 = vmul.f32 %v1931, %v1942
    %v2036 = vmul.f32 %v1932, %v1946
    %v2037 = vmul.f32 %v1933, %v1942
    %v2038 = vmul.f32 %v1934, %v1946
    %v2039 = vmul.f32 %v1935, %v1942
    %v2040 = vmul.f32 %v1936, %v1946
    %v2041 = vmul.f32 %v1937, %v1942
    %v2042 = vmul.f32 %v1938, %v1946
    %v2043 = vlaneseq
    %v2044 = vshrl.u32 %v2043, 7
    %v2045 = vsub.s32 2, %v2044
    %v2046 = vrot.slane %v151, %v2045
    %v2047 = vlaneseq
    %v2048 = vshrl.u32 %v2047, 7
    %v2049 = vsub.s32 2, %v2048
    %v2050 = vrot.slane %v152, %v2049
    %v2051 = vadd.f32 %v1947, %v2046
    %v2052 = vadd.f32 %v1948, %v2050
    %v2053 = vadd.f32 %v1949, %v2046
    %v2054 = vadd.f32 %v1950, %v2050
    %v2055 = vadd.f32 %v1951, %v2046
    %v2056 = vadd.f32 %v1952, %v2050
    %v2057 = vadd.f32 %v1953, %v2046
    %v2058 = vadd.f32 %v1954, %v2050
    %v2059 = vadd.f32 %v1955, %v2046
    %v2060 = vadd.f32 %v1956, %v2050
    %v2061 = vadd.f32 %v1957, %v2046
    %v2062 = vadd.f32 %v1958, %v2050
    %v2063 = vadd.f32 %v1959, %v2046
    %v2064 = vadd.f32 %v1960, %v2050
    %v2065 = vadd.f32 %v1961, %v2046
    %v2066 = vadd.f32 %v1962, %v2050
    %v2067 = vadd.f32 %v1963, %v2046
    %v2068 = vadd.f32 %v1964, %v2050
    %v2069 = vadd.f32 %v1965, %v2046
    %v2070 = vadd.f32 %v1966, %v2050
    %v2071 = vadd.f32 %v1967, %v2046
    %v2072 = vadd.f32 %v1968, %v2050
    %v2073 = vadd.f32 %v1969, %v2046
    %v2074 = vadd.f32 %v1970, %v2050
    %v2075 = vadd.f32 %v1971, %v2046
    %v2076 = vadd.f32 %v1972, %v2050
    %v2077 = vadd.f32 %v1973, %v2046
    %v2078 = vadd.f32 %v1974, %v2050
    %v2079 = vadd.f32 %v1975, %v2046
    %v2080 = vadd.f32 %v1976, %v2050
    %v2081 = vadd.f32 %v1977, %v2046
    %v2082 = vadd.f32 %v1978, %v2050
    %v2083 = vadd.f32 %v1979, %v2046
    %v2084 = vadd.f32 %v1980, %v2050
    %v2085 = vadd.f32 %v1981, %v2046
    %v2086 = vadd.f32 %v1982, %v2050
    %v2087 = vadd.f32 %v1983, %v2046
    %v2088 = vadd.f32 %v1984, %v2050
    %v2089 = vadd.f32 %v1985, %v2046
    %v2090 = vadd.f32 %v1986, %v2050
    %v2091 = vadd.f32 %v1987, %v2046
    %v2092 = vadd.f32 %v1988, %v2050
    %v2093 = vadd.f32 %v1989, %v2046
    %v2094 = vadd.f32 %v1990, %v2050
    %v2095 = vadd.f32 %v1991, %v2046
    %v2096 = vadd.f32 %v1992, %v2050
    %v2097 = vadd.f32 %v1993, %v2046
    %v2098 = vadd.f32 %v1994, %v2050
    %v2099 = vadd.f32 %v1995, %v2046
    %v2100 = vadd.f32 %v1996, %v2050
    %v2101 = vadd.f32 %v1997, %v2046
    %v2102 = vadd.f32 %v1998, %v2050
    %v2103 = vadd.f32 %v1999, %v2046
    %v2104 = vadd.f32 %v2000, %v2050
    %v2105 = vadd.f32 %v2001, %v2046
    %v2106 = vadd.f32 %v2002, %v2050
    %v2107 = vadd.f32 %v2003, %v2046
    %v2108 = vadd.f32 %v2004, %v2050
    %v2109 = vadd.f32 %v2005, %v2046
    %v2110 = vadd.f32 %v2006, %v2050
    %v2111 = vadd.f32 %v2007, %v2046
    %v2112 = vadd.f32 %v2008, %v2050
    %v2113 = vadd.f32 %v2009, %v2046
    %v2114 = vadd.f32 %v2010, %v2050
    %v2115 = vadd.f32 %v2011, %v2046
    %v2116 = vadd.f32 %v2012, %v2050
    %v2117 = vadd.f32 %v2013, %v2046
    %v2118 = vadd.f32 %v2014, %v2050
    %v2119 = vadd.f32 %v2015, %v2046
    %v2120 = vadd.f32 %v2016, %v2050
    %v2121 = vadd.f32 %v2017, %v2046
    %v2122 = vadd.f32 %v2018, %v2050
    %v2123 = vadd.f32 %v2019, %v2046
    %v2124 = vadd.f32 %v2020, %v2050
    %v2125 = vadd.f32 %v2021, %v2046
    %v2126 = vadd.f32 %v2022, %v2050
    %v2127 = vadd.f32 %v2023, %v2046
    %v2128 = vadd.f32 %v2024, %v2050
    %v2129 = vadd.f32 %v2025, %v2046
    %v2130 = vadd.f32 %v2026, %v2050
    %v2131 = vadd.f32 %v2027, %v2046
    %v2132 = vadd.f32 %v2028, %v2050
    %v2133 = vadd.f32 %v2029, %v2046
    %v2134 = vadd.f32 %v2030, %v2050
    %v2135 = vadd.f32 %v2031, %v2046
    %v2136 = vadd.f32 %v2032, %v2050
    %v2137 = vadd.f32 %v2033, %v2046
    %v2138 = vadd.f32 %v2034, %v2050
    %v2139 = vadd.f32 %v2035, %v2046
    %v2140 = vadd.f32 %v2036, %v2050
    %v2141 = vadd.f32 %v2037, %v2046
    %v2142 = vadd.f32 %v2038, %v2050
    %v2143 = vadd.f32 %v2039, %v2046
    %v2144 = vadd.f32 %v2040, %v2050
    %v2145 = vadd.f32 %v2041, %v2046
    %v2146 = vadd.f32 %v2042, %v2050
    %2147 = vst [vmem:[#allocation10] sm:$0xff] %v2051
    %2148 = vst [vmem:[#allocation10 + $0x8] sm:$0xff] %v2052
    %2149 = vst [vmem:[#allocation10 + $0x10] sm:$0xff] %v2053
    %2150 = vst [vmem:[#allocation10 + $0x18] sm:$0xff] %v2054
    %2151 = vst [vmem:[#allocation10 + $0x20] sm:$0xff] %v2055
    %2152 = vst [vmem:[#allocation10 + $0x28] sm:$0xff] %v2056
    %2153 = vst [vmem:[#allocation10 + $0x30] sm:$0xff] %v2057
    %2154 = vst [vmem:[#allocation10 + $0x38] sm:$0xff] %v2058
    %2155 = vst [vmem:[#allocation10 + $0x40] sm:$0xff] %v2059
    %2156 = vst [vmem:[#allocation10 + $0x48] sm:$0xff] %v2060
    %2157 = vst [vmem:[#allocation10 + $0x50] sm:$0xff] %v2061
    %2158 = vst [vmem:[#allocation10 + $0x58] sm:$0xff] %v2062
    %2159 = vst [vmem:[#allocation10 + $0x60] sm:$0xff] %v2063
    %2160 = vst [vmem:[#allocation10 + $0x68] sm:$0xff] %v2064
    %2161 = vst [vmem:[#allocation10 + $0x70] sm:$0xff] %v2065
    %2162 = vst [vmem:[#allocation10 + $0x78] sm:$0xff] %v2066
    %2163 = vst [vmem:[#allocation10 + $0x80] sm:$0xff] %v2067
    %2164 = vst [vmem:[#allocation10 + $0x88] sm:$0xff] %v2068
    %2165 = vst [vmem:[#allocation10 + $0x90] sm:$0xff] %v2069
    %2166 = vst [vmem:[#allocation10 + $0x98] sm:$0xff] %v2070
    %2167 = vst [vmem:[#allocation10 + $0xa0] sm:$0xff] %v2071
    %2168 = vst [vmem:[#allocation10 + $0xa8] sm:$0xff] %v2072
    %2169 = vst [vmem:[#allocation10 + $0xb0] sm:$0xff] %v2073
    %2170 = vst [vmem:[#allocation10 + $0xb8] sm:$0xff] %v2074
    %2171 = vst [vmem:[#allocation10 + $0xc0] sm:$0xff] %v2075
    %2172 = vst [vmem:[#allocation10 + $0xc8] sm:$0xff] %v2076
    %2173 = vst [vmem:[#allocation10 + $0xd0] sm:$0xff] %v2077
    %2174 = vst [vmem:[#allocation10 + $0xd8] sm:$0xff] %v2078
    %2175 = vst [vmem:[#allocation10 + $0xe0] sm:$0xff] %v2079
    %2176 = vst [vmem:[#allocation10 + $0xe8] sm:$0xff] %v2080
    %2177 = vst [vmem:[#allocation10 + $0xf0] sm:$0xff] %v2081
    %2178 = vst [vmem:[#allocation10 + $0xf8] sm:$0xff] %v2082
    %2179 = vst [vmem:[#allocation10 + $0x100] sm:$0xff] %v2083
    %2180 = vst [vmem:[#allocation10 + $0x108] sm:$0xff] %v2084
    %2181 = vst [vmem:[#allocation10 + $0x110] sm:$0xff] %v2085
    %2182 = vst [vmem:[#allocation10 + $0x118] sm:$0xff] %v2086
    %2183 = vst [vmem:[#allocation10 + $0x120] sm:$0xff] %v2087
    %2184 = vst [vmem:[#allocation10 + $0x128] sm:$0xff] %v2088
    %2185 = vst [vmem:[#allocation10 + $0x130] sm:$0xff] %v2089
    %2186 = vst [vmem:[#allocation10 + $0x138] sm:$0xff] %v2090
    %2187 = vst [vmem:[#allocation10 + $0x140] sm:$0xff] %v2091
    %2188 = vst [vmem:[#allocation10 + $0x148] sm:$0xff] %v2092
    %2189 = vst [vmem:[#allocation10 + $0x150] sm:$0xff] %v2093
    %2190 = vst [vmem:[#allocation10 + $0x158] sm:$0xff] %v2094
    %2191 = vst [vmem:[#allocation10 + $0x160] sm:$0xff] %v2095
    %2192 = vst [vmem:[#allocation10 + $0x168] sm:$0xff] %v2096
    %2193 = vst [vmem:[#allocation10 + $0x170] sm:$0xff] %v2097
    %2194 = vst [vmem:[#allocation10 + $0x178] sm:$0xff] %v2098
    %2195 = vst [vmem:[#allocation10 + $0x180] sm:$0xff] %v2099
    %2196 = vst [vmem:[#allocation10 + $0x188] sm:$0xff] %v2100
    %2197 = vst [vmem:[#allocation10 + $0x190] sm:$0xff] %v2101
    %2198 = vst [vmem:[#allocation10 + $0x198] sm:$0xff] %v2102
    %2199 = vst [vmem:[#allocation10 + $0x1a0] sm:$0xff] %v2103
    %2200 = vst [vmem:[#allocation10 + $0x1a8] sm:$0xff] %v2104
    %2201 = vst [vmem:[#allocation10 + $0x1b0] sm:$0xff] %v2105
    %2202 = vst [vmem:[#allocation10 + $0x1b8] sm:$0xff] %v2106
    %2203 = vst [vmem:[#allocation10 + $0x1c0] sm:$0xff] %v2107
    %2204 = vst [vmem:[#allocation10 + $0x1c8] sm:$0xff] %v2108
    %2205 = vst [vmem:[#allocation10 + $0x1d0] sm:$0xff] %v2109
    %2206 = vst [vmem:[#allocation10 + $0x1d8] sm:$0xff] %v2110
    %2207 = vst [vmem:[#allocation10 + $0x1e0] sm:$0xff] %v2111
    %2208 = vst [vmem:[#allocation10 + $0x1e8] sm:$0xff] %v2112
    %2209 = vst [vmem:[#allocation10 + $0x1f0] sm:$0xff] %v2113
    %2210 = vst [vmem:[#allocation10 + $0x1f8] sm:$0xff] %v2114
    %2211 = vst [vmem:[#allocation10 + $0x200] sm:$0xff] %v2115
    %2212 = vst [vmem:[#allocation10 + $0x208] sm:$0xff] %v2116
    %2213 = vst [vmem:[#allocation10 + $0x210] sm:$0xff] %v2117
    %2214 = vst [vmem:[#allocation10 + $0x218] sm:$0xff] %v2118
    %2215 = vst [vmem:[#allocation10 + $0x220] sm:$0xff] %v2119
    %2216 = vst [vmem:[#allocation10 + $0x228] sm:$0xff] %v2120
    %2217 = vst [vmem:[#allocation10 + $0x230] sm:$0xff] %v2121
    %2218 = vst [vmem:[#allocation10 + $0x238] sm:$0xff] %v2122
    %2219 = vst [vmem:[#allocation10 + $0x240] sm:$0xff] %v2123
    %2220 = vst [vmem:[#allocation10 + $0x248] sm:$0xff] %v2124
    %2221 = vst [vmem:[#allocation10 + $0x250] sm:$0xff] %v2125
    %2222 = vst [vmem:[#allocation10 + $0x258] sm:$0xff] %v2126
    %2223 = vst [vmem:[#allocation10 + $0x260] sm:$0xff] %v2127
    %2224 = vst [vmem:[#allocation10 + $0x268] sm:$0xff] %v2128
    %2225 = vst [vmem:[#allocation10 + $0x270] sm:$0xff] %v2129
    %2226 = vst [vmem:[#allocation10 + $0x278] sm:$0xff] %v2130
    %2227 = vst [vmem:[#allocation10 + $0x280] sm:$0xff] %v2131
    %2228 = vst [vmem:[#allocation10 + $0x288] sm:$0xff] %v2132
    %2229 = vst [vmem:[#allocation10 + $0x290] sm:$0xff] %v2133
    %2230 = vst [vmem:[#allocation10 + $0x298] sm:$0xff] %v2134
    %2231 = vst [vmem:[#allocation10 + $0x2a0] sm:$0xff] %v2135
    %2232 = vst [vmem:[#allocation10 + $0x2a8] sm:$0xff] %v2136
    %2233 = vst [vmem:[#allocation10 + $0x2b0] sm:$0xff] %v2137
    %2234 = vst [vmem:[#allocation10 + $0x2b8] sm:$0xff] %v2138
    %2235 = vst [vmem:[#allocation10 + $0x2c0] sm:$0xff] %v2139
    %2236 = vst [vmem:[#allocation10 + $0x2c8] sm:$0xff] %v2140
    %2237 = vst [vmem:[#allocation10 + $0x2d0] sm:$0xff] %v2141
    %2238 = vst [vmem:[#allocation10 + $0x2d8] sm:$0xff] %v2142
    %2239 = vst [vmem:[#allocation10 + $0x2e0] sm:$0xff] %v2143
    %2240 = vst [vmem:[#allocation10 + $0x2e8] sm:$0xff] %v2144
    %2241 = vst [vmem:[#allocation10 + $0x2f0] sm:$0xff] %v2145
    %2242 = vst [vmem:[#allocation10 + $0x2f8] sm:$0xff] %v2146
    // Predicated region
    $region34: #{tpu_custom_call.1} parent=1 // pred_check
      _
    $region35: #{tpu_custom_call.1} parent=1 // pred_check_branch
      %2244 = sbr.rel (0) target = $region37
    $region36: #{tpu_custom_call.1} parent=1 // pred_region
      %s2246 = ssub.s32 12288, 12288
      %2247 = vsyncadd [#allocation4], %s2246
      %s2248 = sshll.u32 [#allocation10], 4
      %s2249 = int_to_ptr.vmem [resolvable:$true] %s2248
      %2254 = dma.vmem_to_hbm [thread:$0]  %s2249, 12288, %s4, [#allocation4], 256, 256, 16
    $region37: #{tpu_custom_call.1} parent=1 // pred_fallthru
      _
    // Predicated region
    $region38: #{tpu_custom_call.1} parent=1 // pred_check
      _
    $region39: #{tpu_custom_call.1} parent=1 // pred_check_branch
      %2256 = sbr.rel (0) target = $region41
    $region40: #{tpu_custom_call.1} parent=1 // pred_region
      %2257 = dma.done [#allocation4], 12288
    $region41: #{tpu_custom_call.1} parent=1 // pred_fallthru
      _
    %2258 = vsyncpa [#allocation3], 1
    %2259 = vsyncpa [#allocation6], 1
    %2260 = vsyncpa [#allocation9], 1
    %2261 = vsyncpa [#allocation4], 1

</llo_original>
